<compile_context>
chip_gen: v5e
topology: v5e:2x2
jax: 0.10.0
libtpu: 0.0.40
codegen_flags: <defaults>
</compile_context>

<pallas_src>
import functools
import math

import jax
import jax.numpy as jnp
from jax.experimental import pallas as pl
from jax.experimental.pallas import tpu as pltpu


def _mha_kernel(q_ref, k_ref, v_ref,
                wq_ref, wk_ref, wv_ref,
                bq_ref, bk_ref, bv_ref,
                o_ref, *, heads, seq, inv_scale):
    # q/k/v_ref : (R, d_model)        R = batches_per_block * seq (flattened rows)
    # w*_ref    : (heads, d_model, dh) per-head projection weights (VMEM-resident)
    # b*_ref    : (heads, 1, dh)
    # o_ref     : (R, d_model)
    r_rows, dm = q_ref.shape
    dh = dm // heads
    bb = r_rows // seq                 # whole batches in this block

    q = q_ref[...]                     # (R, dm)
    k = k_ref[...]
    v = v_ref[...]

    for h in range(heads):             # static unroll; heads is small
        # Per-head projections: (R, dm) @ (dm, dh) + (1, dh).
        # Weight columns were split per head in the wrapper, so no in-kernel
        # lane slicing of activations is needed.
        qh = (jnp.dot(q, wq_ref[h], preferred_element_type=jnp.float32)
              + bq_ref[h]).reshape(bb, seq, dh)
        kh = (jnp.dot(k, wk_ref[h], preferred_element_type=jnp.float32)
              + bk_ref[h]).reshape(bb, seq, dh)
        vh = (jnp.dot(v, wv_ref[h], preferred_element_type=jnp.float32)
              + bv_ref[h]).reshape(bb, seq, dh)

        # Attention for this head, batched over the bb batches in the block.
        s = jnp.einsum('bqd,bkd->bqk', qh, kh,
                       preferred_element_type=jnp.float32) * inv_scale
        m = jnp.max(s, axis=-1, keepdims=True)
        p = jnp.exp(s - m)
        l = jnp.sum(p, axis=-1, keepdims=True)
        attn = p / l                   # exact divide (matches torch softmax)
        ctx = jnp.einsum('bqk,bkd->bqd', attn, vh,
                         preferred_element_type=jnp.float32)   # (bb, seq, dh)

        # Write this head's context straight into its column range of the
        # output block (no concat chain).
        o_ref[:, h * dh:(h + 1) * dh] = ctx.reshape(r_rows, dh).astype(o_ref.dtype)


def multi_head_attention(query, key, value, params, *, d_model, heads,
                         row_blocks=2):
    """Pallas implementation of the PyTorch MultiHeadAttention.forward."""
    B, S, dm = query.shape
    assert dm == d_model
    N = value.shape[0]                 # mirrors the PyTorch module
    assert N == S, "module's .view(batch, N, heads, dh) requires seq == batch"
    dh = d_model // heads
    rows = B * S
    assert rows % row_blocks == 0
    rb = rows // row_blocks
    assert rb % S == 0, "each grid block must contain whole batch rows"
    inv_scale = 1.0 / math.sqrt(d_model)   # module scale = sqrt(d_model)

    # PyTorch Linear: y = x @ W^T + b.  Split the transposed weights / biases
    # per head once in the wrapper (in real use: at parameter-load time).
    def _per_head_w(w):                # w: (out, in) torch layout
        return jnp.transpose(w.T.reshape(d_model, heads, dh), (1, 0, 2))
    def _per_head_b(b):
        return b.reshape(heads, 1, dh)

    wq, wk, wv = (_per_head_w(params["wq"]), _per_head_w(params["wk"]),
                  _per_head_w(params["wv"]))
    bq, bk, bv = (_per_head_b(params["bq"]), _per_head_b(params["bk"]),
                  _per_head_b(params["bv"]))

    # Flatten (B, S, dm) -> (B*S, dm): free metadata reshape; projections see
    # M = rb rows per grid step.
    q2 = query.reshape(rows, d_model)
    k2 = key.reshape(rows, d_model)
    v2 = value.reshape(rows, d_model)

    row_spec = pl.BlockSpec((rb, d_model), lambda i: (i, 0))
    # Constant block index => weights/biases stay resident in VMEM across steps.
    w_spec = pl.BlockSpec((heads, d_model, dh), lambda i: (0, 0, 0))
    b_spec = pl.BlockSpec((heads, 1, dh), lambda i: (0, 0, 0))

    out = pl.pallas_call(
        functools.partial(_mha_kernel, heads=heads, seq=S, inv_scale=inv_scale),
        out_shape=jax.ShapeDtypeStruct((rows, d_model), query.dtype),
        grid_spec=pl.GridSpec(
            grid=(row_blocks,),
            in_specs=[row_spec, row_spec, row_spec,
                      w_spec, w_spec, w_spec,
                      b_spec, b_spec, b_spec],
            out_specs=row_spec,
        ),
        compiler_params=pltpu.CompilerParams(
            dimension_semantics=("parallel",)),   # v7x: 2 TCs split the blocks
    )(q2, k2, v2, wq, wk, wv, bq, bk, bv)
    return out.reshape(B, S, d_model)


def _reference(query, key, value, params, *, d_model, heads):
    """Pure-JAX reference mirroring the PyTorch forward exactly."""
    B, S, _ = query.shape
    dh = d_model // heads
    scale = jnp.sqrt(jnp.float32(d_model))
    q = query @ params["wq"].T + params["bq"]
    k = key @ params["wk"].T + params["bk"]
    v = value @ params["wv"].T + params["bv"]
    q = jnp.transpose(q.reshape(B, S, heads, dh), (0, 2, 1, 3))
    k = jnp.transpose(k.reshape(B, S, heads, dh), (0, 2, 1, 3))
    v = jnp.transpose(v.reshape(B, S, heads, dh), (0, 2, 1, 3))
    attn = jax.nn.softmax(jnp.einsum("bhqd,bhkd->bhqk", q, k) / scale, axis=-1)
    ctx = jnp.einsum("bhqk,bhkd->bhqd", attn, v)
    return jnp.transpose(ctx, (0, 2, 1, 3)).reshape(B, S, d_model)


if __name__ == "__main__":
    d_model, heads = 32, 4
    B = S = 8  # module requires value.shape[0] (=batch) == seq for its .view

    key0 = jax.random.PRNGKey(0)
    ks = jax.random.split(key0, 9)
    params = {
        "wq": jax.random.normal(ks[0], (d_model, d_model), jnp.float32) * 0.1,
        "wk": jax.random.normal(ks[1], (d_model, d_model), jnp.float32) * 0.1,
        "wv": jax.random.normal(ks[2], (d_model, d_model), jnp.float32) * 0.1,
        "bq": jax.random.normal(ks[3], (d_model,), jnp.float32) * 0.1,
        "bk": jax.random.normal(ks[4], (d_model,), jnp.float32) * 0.1,
        "bv": jax.random.normal(ks[5], (d_model,), jnp.float32) * 0.1,
    }
    query = jax.random.normal(ks[6], (B, S, d_model), jnp.float32)
    key_in = jax.random.normal(ks[7], (B, S, d_model), jnp.float32)
    value = jax.random.normal(ks[8], (B, S, d_model), jnp.float32)

    out = multi_head_attention(query, key_in, value, params,
                               d_model=d_model, heads=heads)
    out = jax.block_until_ready(out)

    ref = _reference(query, key_in, value, params, d_model=d_model, heads=heads)
    assert out.shape == (B, S, d_model)
    assert jnp.allclose(out, ref, atol=1e-4, rtol=1e-4), "mismatch vs reference"
    print("KERNEL_OK")
</pallas_src>

<mosaic_0001>
module attributes {stable_mosaic.version = 11 : i64} {
  func.func @_mha_kernel(%arg0: i32, %arg1: memref<32x32xf32, #tpu.memory_space<vmem>>, %arg2: memref<32x32xf32, #tpu.memory_space<vmem>>, %arg3: memref<32x32xf32, #tpu.memory_space<vmem>>, %arg4: memref<4x32x8xf32, #tpu.memory_space<vmem>>, %arg5: memref<4x32x8xf32, #tpu.memory_space<vmem>>, %arg6: memref<4x32x8xf32, #tpu.memory_space<vmem>>, %arg7: memref<4x1x8xf32, #tpu.memory_space<vmem>>, %arg8: memref<4x1x8xf32, #tpu.memory_space<vmem>>, %arg9: memref<4x1x8xf32, #tpu.memory_space<vmem>>, %arg10: memref<32x32xf32, #tpu.memory_space<vmem>>) attributes {dimension_semantics = [#tpu.dimension_semantics<parallel>], iteration_bounds = array<i64: 2>, scalar_prefetch = 0 : i64, scratch_operands = 0 : i64, tpu.core_type = #tpu.core_type<tc>, window_params = [{transform_indices = @transform_0, window_bounds = array<i64: 32, 32>}, {transform_indices = @transform_1, window_bounds = array<i64: 32, 32>}, {transform_indices = @transform_2, window_bounds = array<i64: 32, 32>}, {pipeline_mode = #tpu.pipeline_mode<synchronous>, transform_indices = @transform_3, window_bounds = array<i64: 4, 32, 8>}, {pipeline_mode = #tpu.pipeline_mode<synchronous>, transform_indices = @transform_4, window_bounds = array<i64: 4, 32, 8>}, {pipeline_mode = #tpu.pipeline_mode<synchronous>, transform_indices = @transform_5, window_bounds = array<i64: 4, 32, 8>}, {pipeline_mode = #tpu.pipeline_mode<synchronous>, transform_indices = @transform_6, window_bounds = array<i64: 4, 1, 8>}, {pipeline_mode = #tpu.pipeline_mode<synchronous>, transform_indices = @transform_7, window_bounds = array<i64: 4, 1, 8>}, {pipeline_mode = #tpu.pipeline_mode<synchronous>, transform_indices = @transform_8, window_bounds = array<i64: 4, 1, 8>}, {transform_indices = @transform_9, window_bounds = array<i64: 32, 32>}]} {
    %c0 = arith.constant 0 : index
    %c0_0 = arith.constant 0 : index
    %0 = vector.load %arg1[%c0, %c0_0] : memref<32x32xf32, #tpu.memory_space<vmem>>, vector<32x32xf32>
    %c0_1 = arith.constant 0 : index
    %c0_2 = arith.constant 0 : index
    %1 = vector.load %arg2[%c0_1, %c0_2] : memref<32x32xf32, #tpu.memory_space<vmem>>, vector<32x32xf32>
    %c0_3 = arith.constant 0 : index
    %c0_4 = arith.constant 0 : index
    %2 = vector.load %arg3[%c0_3, %c0_4] : memref<32x32xf32, #tpu.memory_space<vmem>>, vector<32x32xf32>
    %c0_5 = arith.constant 0 : index
    %c0_6 = arith.constant 0 : index
    %c0_7 = arith.constant 0 : index
    %3 = vector.load %arg4[%c0_5, %c0_6, %c0_7] : memref<4x32x8xf32, #tpu.memory_space<vmem>>, vector<1x32x8xf32>
    %4 = vector.shape_cast %3 : vector<1x32x8xf32> to vector<32x8xf32>
    %cst = arith.constant dense<0.000000e+00> : vector<32x8xf32>
    %5 = tpu.matmul %0, %4, %cst {dimension_numbers = #tpu.dot_dimension_numbers<[1], [0], [0], [1], [0, 0, 1, 1], [], []>} : vector<32x32xf32>, vector<32x8xf32>, vector<32x8xf32> -> vector<32x8xf32>
    %c0_8 = arith.constant 0 : index
    %c0_9 = arith.constant 0 : index
    %c0_10 = arith.constant 0 : index
    %6 = vector.load %arg7[%c0_8, %c0_9, %c0_10] : memref<4x1x8xf32, #tpu.memory_space<vmem>>, vector<1x1x8xf32>
    %7 = vector.shape_cast %6 : vector<1x1x8xf32> to vector<1x8xf32>
    %8 = vector.broadcast %7 : vector<1x8xf32> to vector<32x8xf32>
    %9 = arith.addf %5, %8 : vector<32x8xf32>
    %10 = vector.shape_cast %9 : vector<32x8xf32> to vector<4x8x8xf32>
    %c0_11 = arith.constant 0 : index
    %c0_12 = arith.constant 0 : index
    %c0_13 = arith.constant 0 : index
    %11 = vector.load %arg5[%c0_11, %c0_12, %c0_13] : memref<4x32x8xf32, #tpu.memory_space<vmem>>, vector<1x32x8xf32>
    %12 = vector.shape_cast %11 : vector<1x32x8xf32> to vector<32x8xf32>
    %cst_14 = arith.constant dense<0.000000e+00> : vector<32x8xf32>
    %13 = tpu.matmul %1, %12, %cst_14 {dimension_numbers = #tpu.dot_dimension_numbers<[1], [0], [0], [1], [0, 0, 1, 1], [], []>} : vector<32x32xf32>, vector<32x8xf32>, vector<32x8xf32> -> vector<32x8xf32>
    %c0_15 = arith.constant 0 : index
    %c0_16 = arith.constant 0 : index
    %c0_17 = arith.constant 0 : index
    %14 = vector.load %arg8[%c0_15, %c0_16, %c0_17] : memref<4x1x8xf32, #tpu.memory_space<vmem>>, vector<1x1x8xf32>
    %15 = vector.shape_cast %14 : vector<1x1x8xf32> to vector<1x8xf32>
    %16 = vector.broadcast %15 : vector<1x8xf32> to vector<32x8xf32>
    %17 = arith.addf %13, %16 : vector<32x8xf32>
    %18 = vector.shape_cast %17 : vector<32x8xf32> to vector<4x8x8xf32>
    %c0_18 = arith.constant 0 : index
    %c0_19 = arith.constant 0 : index
    %c0_20 = arith.constant 0 : index
    %19 = vector.load %arg6[%c0_18, %c0_19, %c0_20] : memref<4x32x8xf32, #tpu.memory_space<vmem>>, vector<1x32x8xf32>
    %20 = vector.shape_cast %19 : vector<1x32x8xf32> to vector<32x8xf32>
    %cst_21 = arith.constant dense<0.000000e+00> : vector<32x8xf32>
    %21 = tpu.matmul %2, %20, %cst_21 {dimension_numbers = #tpu.dot_dimension_numbers<[1], [0], [0], [1], [0, 0, 1, 1], [], []>} : vector<32x32xf32>, vector<32x8xf32>, vector<32x8xf32> -> vector<32x8xf32>
    %c0_22 = arith.constant 0 : index
    %c0_23 = arith.constant 0 : index
    %c0_24 = arith.constant 0 : index
    %22 = vector.load %arg9[%c0_22, %c0_23, %c0_24] : memref<4x1x8xf32, #tpu.memory_space<vmem>>, vector<1x1x8xf32>
    %23 = vector.shape_cast %22 : vector<1x1x8xf32> to vector<1x8xf32>
    %24 = vector.broadcast %23 : vector<1x8xf32> to vector<32x8xf32>
    %25 = arith.addf %21, %24 : vector<32x8xf32>
    %26 = vector.shape_cast %25 : vector<32x8xf32> to vector<4x8x8xf32>
    "tpu.trace_start"() <{level = 10 : i32, message = "bqd,bkd->bqk"}> : () -> ()
    %cst_25 = arith.constant dense<0.000000e+00> : vector<4x8x8xf32>
    %27 = tpu.matmul %10, %18, %cst_25 {dimension_numbers = #tpu.dot_dimension_numbers<[2], [2], [1], [1], [0, 0, 0, 1, 1, 1], [0], [0]>} : vector<4x8x8xf32>, vector<4x8x8xf32>, vector<4x8x8xf32> -> vector<4x8x8xf32>
    "tpu.trace_stop"() : () -> ()
    %cst_26 = arith.constant 0.176776692 : f32
    %28 = vector.broadcast %cst_26 : f32 to vector<4x8x8xf32>
    %29 = arith.mulf %27, %28 : vector<4x8x8xf32>
    %cst_27 = arith.constant dense<0xFF800000> : vector<4x8xf32>
    %30 = vector.multi_reduction <maximumf>, %29, %cst_27 [2] : vector<4x8x8xf32> to vector<4x8xf32>
    %31 = vector.shape_cast %30 : vector<4x8xf32> to vector<4x8x1xf32>
    %32 = vector.broadcast %31 : vector<4x8x1xf32> to vector<4x8x8xf32>
    %33 = arith.subf %29, %32 : vector<4x8x8xf32>
    %34 = math.exp %33 : vector<4x8x8xf32>
    %cst_28 = arith.constant dense<0.000000e+00> : vector<4x8xf32>
    %35 = vector.multi_reduction <add>, %34, %cst_28 [2] : vector<4x8x8xf32> to vector<4x8xf32>
    %36 = vector.shape_cast %35 : vector<4x8xf32> to vector<4x8x1xf32>
    %37 = vector.broadcast %36 : vector<4x8x1xf32> to vector<4x8x8xf32>
    %38 = arith.divf %34, %37 : vector<4x8x8xf32>
    "tpu.trace_start"() <{level = 10 : i32, message = "bqk,bkd->bqd"}> : () -> ()
    %cst_29 = arith.constant dense<0.000000e+00> : vector<4x8x8xf32>
    %39 = tpu.matmul %38, %26, %cst_29 {dimension_numbers = #tpu.dot_dimension_numbers<[2], [1], [1], [2], [0, 0, 0, 1, 1, 2], [0], [0]>} : vector<4x8x8xf32>, vector<4x8x8xf32>, vector<4x8x8xf32> -> vector<4x8x8xf32>
    "tpu.trace_stop"() : () -> ()
    %40 = vector.shape_cast %39 : vector<4x8x8xf32> to vector<32x8xf32>
    %c0_30 = arith.constant 0 : index
    %c0_31 = arith.constant 0 : index
    %41 = vector.load %arg10[%c0_30, %c0_31] : memref<32x32xf32, #tpu.memory_space<vmem>>, vector<32x8xf32>
    tpu.vector_store %arg10[%c0_30, %c0_31], %40 {strides = array<i32>} : memref<32x32xf32, #tpu.memory_space<vmem>>, vector<32x8xf32>,
    %c1 = arith.constant 1 : index
    %c0_32 = arith.constant 0 : index
    %c0_33 = arith.constant 0 : index
    %42 = vector.load %arg4[%c1, %c0_32, %c0_33] : memref<4x32x8xf32, #tpu.memory_space<vmem>>, vector<1x32x8xf32>
    %43 = vector.shape_cast %42 : vector<1x32x8xf32> to vector<32x8xf32>
    %cst_34 = arith.constant dense<0.000000e+00> : vector<32x8xf32>
    %44 = tpu.matmul %0, %43, %cst_34 {dimension_numbers = #tpu.dot_dimension_numbers<[1], [0], [0], [1], [0, 0, 1, 1], [], []>} : vector<32x32xf32>, vector<32x8xf32>, vector<32x8xf32> -> vector<32x8xf32>
    %c1_35 = arith.constant 1 : index
    %c0_36 = arith.constant 0 : index
    %c0_37 = arith.constant 0 : index
    %45 = vector.load %arg7[%c1_35, %c0_36, %c0_37] : memref<4x1x8xf32, #tpu.memory_space<vmem>>, vector<1x1x8xf32>
    %46 = vector.shape_cast %45 : vector<1x1x8xf32> to vector<1x8xf32>
    %47 = vector.broadcast %46 : vector<1x8xf32> to vector<32x8xf32>
    %48 = arith.addf %44, %47 : vector<32x8xf32>
    %49 = vector.shape_cast %48 : vector<32x8xf32> to vector<4x8x8xf32>
    %c1_38 = arith.constant 1 : index
    %c0_39 = arith.constant 0 : index
    %c0_40 = arith.constant 0 : index
    %50 = vector.load %arg5[%c1_38, %c0_39, %c0_40] : memref<4x32x8xf32, #tpu.memory_space<vmem>>, vector<1x32x8xf32>
    %51 = vector.shape_cast %50 : vector<1x32x8xf32> to vector<32x8xf32>
    %cst_41 = arith.constant dense<0.000000e+00> : vector<32x8xf32>
    %52 = tpu.matmul %1, %51, %cst_41 {dimension_numbers = #tpu.dot_dimension_numbers<[1], [0], [0], [1], [0, 0, 1, 1], [], []>} : vector<32x32xf32>, vector<32x8xf32>, vector<32x8xf32> -> vector<32x8xf32>
    %c1_42 = arith.constant 1 : index
    %c0_43 = arith.constant 0 : index
    %c0_44 = arith.constant 0 : index
    %53 = vector.load %arg8[%c1_42, %c0_43, %c0_44] : memref<4x1x8xf32, #tpu.memory_space<vmem>>, vector<1x1x8xf32>
    %54 = vector.shape_cast %53 : vector<1x1x8xf32> to vector<1x8xf32>
    %55 = vector.broadcast %54 : vector<1x8xf32> to vector<32x8xf32>
    %56 = arith.addf %52, %55 : vector<32x8xf32>
    %57 = vector.shape_cast %56 : vector<32x8xf32> to vector<4x8x8xf32>
    %c1_45 = arith.constant 1 : index
    %c0_46 = arith.constant 0 : index
    %c0_47 = arith.constant 0 : index
    %58 = vector.load %arg6[%c1_45, %c0_46, %c0_47] : memref<4x32x8xf32, #tpu.memory_space<vmem>>, vector<1x32x8xf32>
    %59 = vector.shape_cast %58 : vector<1x32x8xf32> to vector<32x8xf32>
    %cst_48 = arith.constant dense<0.000000e+00> : vector<32x8xf32>
    %60 = tpu.matmul %2, %59, %cst_48 {dimension_numbers = #tpu.dot_dimension_numbers<[1], [0], [0], [1], [0, 0, 1, 1], [], []>} : vector<32x32xf32>, vector<32x8xf32>, vector<32x8xf32> -> vector<32x8xf32>
    %c1_49 = arith.constant 1 : index
    %c0_50 = arith.constant 0 : index
    %c0_51 = arith.constant 0 : index
    %61 = vector.load %arg9[%c1_49, %c0_50, %c0_51] : memref<4x1x8xf32, #tpu.memory_space<vmem>>, vector<1x1x8xf32>
    %62 = vector.shape_cast %61 : vector<1x1x8xf32> to vector<1x8xf32>
    %63 = vector.broadcast %62 : vector<1x8xf32> to vector<32x8xf32>
    %64 = arith.addf %60, %63 : vector<32x8xf32>
    %65 = vector.shape_cast %64 : vector<32x8xf32> to vector<4x8x8xf32>
    "tpu.trace_start"() <{level = 10 : i32, message = "bqd,bkd->bqk"}> : () -> ()
    %cst_52 = arith.constant dense<0.000000e+00> : vector<4x8x8xf32>
    %66 = tpu.matmul %49, %57, %cst_52 {dimension_numbers = #tpu.dot_dimension_numbers<[2], [2], [1], [1], [0, 0, 0, 1, 1, 1], [0], [0]>} : vector<4x8x8xf32>, vector<4x8x8xf32>, vector<4x8x8xf32> -> vector<4x8x8xf32>
    "tpu.trace_stop"() : () -> ()
    %cst_53 = arith.constant 0.176776692 : f32
    %67 = vector.broadcast %cst_53 : f32 to vector<4x8x8xf32>
    %68 = arith.mulf %66, %67 : vector<4x8x8xf32>
    %cst_54 = arith.constant dense<0xFF800000> : vector<4x8xf32>
    %69 = vector.multi_reduction <maximumf>, %68, %cst_54 [2] : vector<4x8x8xf32> to vector<4x8xf32>
    %70 = vector.shape_cast %69 : vector<4x8xf32> to vector<4x8x1xf32>
    %71 = vector.broadcast %70 : vector<4x8x1xf32> to vector<4x8x8xf32>
    %72 = arith.subf %68, %71 : vector<4x8x8xf32>
    %73 = math.exp %72 : vector<4x8x8xf32>
    %cst_55 = arith.constant dense<0.000000e+00> : vector<4x8xf32>
    %74 = vector.multi_reduction <add>, %73, %cst_55 [2] : vector<4x8x8xf32> to vector<4x8xf32>
    %75 = vector.shape_cast %74 : vector<4x8xf32> to vector<4x8x1xf32>
    %76 = vector.broadcast %75 : vector<4x8x1xf32> to vector<4x8x8xf32>
    %77 = arith.divf %73, %76 : vector<4x8x8xf32>
    "tpu.trace_start"() <{level = 10 : i32, message = "bqk,bkd->bqd"}> : () -> ()
    %cst_56 = arith.constant dense<0.000000e+00> : vector<4x8x8xf32>
    %78 = tpu.matmul %77, %65, %cst_56 {dimension_numbers = #tpu.dot_dimension_numbers<[2], [1], [1], [2], [0, 0, 0, 1, 1, 2], [0], [0]>} : vector<4x8x8xf32>, vector<4x8x8xf32>, vector<4x8x8xf32> -> vector<4x8x8xf32>
    "tpu.trace_stop"() : () -> ()
    %79 = vector.shape_cast %78 : vector<4x8x8xf32> to vector<32x8xf32>
    %c0_57 = arith.constant 0 : index
    %c8 = arith.constant 8 : index
    %80 = vector.load %arg10[%c0_57, %c8] : memref<32x32xf32, #tpu.memory_space<vmem>>, vector<32x8xf32>
    tpu.vector_store %arg10[%c0_57, %c8], %79 {strides = array<i32>} : memref<32x32xf32, #tpu.memory_space<vmem>>, vector<32x8xf32>,
    %c2 = arith.constant 2 : index
    %c0_58 = arith.constant 0 : index
    %c0_59 = arith.constant 0 : index
    %81 = vector.load %arg4[%c2, %c0_58, %c0_59] : memref<4x32x8xf32, #tpu.memory_space<vmem>>, vector<1x32x8xf32>
    %82 = vector.shape_cast %81 : vector<1x32x8xf32> to vector<32x8xf32>
    %cst_60 = arith.constant dense<0.000000e+00> : vector<32x8xf32>
    %83 = tpu.matmul %0, %82, %cst_60 {dimension_numbers = #tpu.dot_dimension_numbers<[1], [0], [0], [1], [0, 0, 1, 1], [], []>} : vector<32x32xf32>, vector<32x8xf32>, vector<32x8xf32> -> vector<32x8xf32>
    %c2_61 = arith.constant 2 : index
    %c0_62 = arith.constant 0 : index
    %c0_63 = arith.constant 0 : index
    %84 = vector.load %arg7[%c2_61, %c0_62, %c0_63] : memref<4x1x8xf32, #tpu.memory_space<vmem>>, vector<1x1x8xf32>
    %85 = vector.shape_cast %84 : vector<1x1x8xf32> to vector<1x8xf32>
    %86 = vector.broadcast %85 : vector<1x8xf32> to vector<32x8xf32>
    %87 = arith.addf %83, %86 : vector<32x8xf32>
    %88 = vector.shape_cast %87 : vector<32x8xf32> to vector<4x8x8xf32>
    %c2_64 = arith.constant 2 : index
    %c0_65 = arith.constant 0 : index
    %c0_66 = arith.constant 0 : index
    %89 = vector.load %arg5[%c2_64, %c0_65, %c0_66] : memref<4x32x8xf32, #tpu.memory_space<vmem>>, vector<1x32x8xf32>
    %90 = vector.shape_cast %89 : vector<1x32x8xf32> to vector<32x8xf32>
    %cst_67 = arith.constant dense<0.000000e+00> : vector<32x8xf32>
    %91 = tpu.matmul %1, %90, %cst_67 {dimension_numbers = #tpu.dot_dimension_numbers<[1], [0], [0], [1], [0, 0, 1, 1], [], []>} : vector<32x32xf32>, vector<32x8xf32>, vector<32x8xf32> -> vector<32x8xf32>
    %c2_68 = arith.constant 2 : index
    %c0_69 = arith.constant 0 : index
    %c0_70 = arith.constant 0 : index
    %92 = vector.load %arg8[%c2_68, %c0_69, %c0_70] : memref<4x1x8xf32, #tpu.memory_space<vmem>>, vector<1x1x8xf32>
    %93 = vector.shape_cast %92 : vector<1x1x8xf32> to vector<1x8xf32>
    %94 = vector.broadcast %93 : vector<1x8xf32> to vector<32x8xf32>
    %95 = arith.addf %91, %94 : vector<32x8xf32>
    %96 = vector.shape_cast %95 : vector<32x8xf32> to vector<4x8x8xf32>
    %c2_71 = arith.constant 2 : index
    %c0_72 = arith.constant 0 : index
    %c0_73 = arith.constant 0 : index
    %97 = vector.load %arg6[%c2_71, %c0_72, %c0_73] : memref<4x32x8xf32, #tpu.memory_space<vmem>>, vector<1x32x8xf32>
    %98 = vector.shape_cast %97 : vector<1x32x8xf32> to vector<32x8xf32>
    %cst_74 = arith.constant dense<0.000000e+00> : vector<32x8xf32>
    %99 = tpu.matmul %2, %98, %cst_74 {dimension_numbers = #tpu.dot_dimension_numbers<[1], [0], [0], [1], [0, 0, 1, 1], [], []>} : vector<32x32xf32>, vector<32x8xf32>, vector<32x8xf32> -> vector<32x8xf32>
    %c2_75 = arith.constant 2 : index
    %c0_76 = arith.constant 0 : index
    %c0_77 = arith.constant 0 : index
    %100 = vector.load %arg9[%c2_75, %c0_76, %c0_77] : memref<4x1x8xf32, #tpu.memory_space<vmem>>, vector<1x1x8xf32>
    %101 = vector.shape_cast %100 : vector<1x1x8xf32> to vector<1x8xf32>
    %102 = vector.broadcast %101 : vector<1x8xf32> to vector<32x8xf32>
    %103 = arith.addf %99, %102 : vector<32x8xf32>
    %104 = vector.shape_cast %103 : vector<32x8xf32> to vector<4x8x8xf32>
    "tpu.trace_start"() <{level = 10 : i32, message = "bqd,bkd->bqk"}> : () -> ()
    %cst_78 = arith.constant dense<0.000000e+00> : vector<4x8x8xf32>
    %105 = tpu.matmul %88, %96, %cst_78 {dimension_numbers = #tpu.dot_dimension_numbers<[2], [2], [1], [1], [0, 0, 0, 1, 1, 1], [0], [0]>} : vector<4x8x8xf32>, vector<4x8x8xf32>, vector<4x8x8xf32> -> vector<4x8x8xf32>
    "tpu.trace_stop"() : () -> ()
    %cst_79 = arith.constant 0.176776692 : f32
    %106 = vector.broadcast %cst_79 : f32 to vector<4x8x8xf32>
    %107 = arith.mulf %105, %106 : vector<4x8x8xf32>
    %cst_80 = arith.constant dense<0xFF800000> : vector<4x8xf32>
    %108 = vector.multi_reduction <maximumf>, %107, %cst_80 [2] : vector<4x8x8xf32> to vector<4x8xf32>
    %109 = vector.shape_cast %108 : vector<4x8xf32> to vector<4x8x1xf32>
    %110 = vector.broadcast %109 : vector<4x8x1xf32> to vector<4x8x8xf32>
    %111 = arith.subf %107, %110 : vector<4x8x8xf32>
    %112 = math.exp %111 : vector<4x8x8xf32>
    %cst_81 = arith.constant dense<0.000000e+00> : vector<4x8xf32>
    %113 = vector.multi_reduction <add>, %112, %cst_81 [2] : vector<4x8x8xf32> to vector<4x8xf32>
    %114 = vector.shape_cast %113 : vector<4x8xf32> to vector<4x8x1xf32>
    %115 = vector.broadcast %114 : vector<4x8x1xf32> to vector<4x8x8xf32>
    %116 = arith.divf %112, %115 : vector<4x8x8xf32>
    "tpu.trace_start"() <{level = 10 : i32, message = "bqk,bkd->bqd"}> : () -> ()
    %cst_82 = arith.constant dense<0.000000e+00> : vector<4x8x8xf32>
    %117 = tpu.matmul %116, %104, %cst_82 {dimension_numbers = #tpu.dot_dimension_numbers<[2], [1], [1], [2], [0, 0, 0, 1, 1, 2], [0], [0]>} : vector<4x8x8xf32>, vector<4x8x8xf32>, vector<4x8x8xf32> -> vector<4x8x8xf32>
    "tpu.trace_stop"() : () -> ()
    %118 = vector.shape_cast %117 : vector<4x8x8xf32> to vector<32x8xf32>
    %c0_83 = arith.constant 0 : index
    %c16 = arith.constant 16 : index
    %119 = vector.load %arg10[%c0_83, %c16] : memref<32x32xf32, #tpu.memory_space<vmem>>, vector<32x8xf32>
    tpu.vector_store %arg10[%c0_83, %c16], %118 {strides = array<i32>} : memref<32x32xf32, #tpu.memory_space<vmem>>, vector<32x8xf32>,
    %c3 = arith.constant 3 : index
    %c0_84 = arith.constant 0 : index
    %c0_85 = arith.constant 0 : index
    %120 = vector.load %arg4[%c3, %c0_84, %c0_85] : memref<4x32x8xf32, #tpu.memory_space<vmem>>, vector<1x32x8xf32>
    %121 = vector.shape_cast %120 : vector<1x32x8xf32> to vector<32x8xf32>
    %cst_86 = arith.constant dense<0.000000e+00> : vector<32x8xf32>
    %122 = tpu.matmul %0, %121, %cst_86 {dimension_numbers = #tpu.dot_dimension_numbers<[1], [0], [0], [1], [0, 0, 1, 1], [], []>} : vector<32x32xf32>, vector<32x8xf32>, vector<32x8xf32> -> vector<32x8xf32>
    %c3_87 = arith.constant 3 : index
    %c0_88 = arith.constant 0 : index
    %c0_89 = arith.constant 0 : index
    %123 = vector.load %arg7[%c3_87, %c0_88, %c0_89] : memref<4x1x8xf32, #tpu.memory_space<vmem>>, vector<1x1x8xf32>
    %124 = vector.shape_cast %123 : vector<1x1x8xf32> to vector<1x8xf32>
    %125 = vector.broadcast %124 : vector<1x8xf32> to vector<32x8xf32>
    %126 = arith.addf %122, %125 : vector<32x8xf32>
    %127 = vector.shape_cast %126 : vector<32x8xf32> to vector<4x8x8xf32>
    %c3_90 = arith.constant 3 : index
    %c0_91 = arith.constant 0 : index
    %c0_92 = arith.constant 0 : index
    %128 = vector.load %arg5[%c3_90, %c0_91, %c0_92] : memref<4x32x8xf32, #tpu.memory_space<vmem>>, vector<1x32x8xf32>
    %129 = vector.shape_cast %128 : vector<1x32x8xf32> to vector<32x8xf32>
    %cst_93 = arith.constant dense<0.000000e+00> : vector<32x8xf32>
    %130 = tpu.matmul %1, %129, %cst_93 {dimension_numbers = #tpu.dot_dimension_numbers<[1], [0], [0], [1], [0, 0, 1, 1], [], []>} : vector<32x32xf32>, vector<32x8xf32>, vector<32x8xf32> -> vector<32x8xf32>
    %c3_94 = arith.constant 3 : index
    %c0_95 = arith.constant 0 : index
    %c0_96 = arith.constant 0 : index
    %131 = vector.load %arg8[%c3_94, %c0_95, %c0_96] : memref<4x1x8xf32, #tpu.memory_space<vmem>>, vector<1x1x8xf32>
    %132 = vector.shape_cast %131 : vector<1x1x8xf32> to vector<1x8xf32>
    %133 = vector.broadcast %132 : vector<1x8xf32> to vector<32x8xf32>
    %134 = arith.addf %130, %133 : vector<32x8xf32>
    %135 = vector.shape_cast %134 : vector<32x8xf32> to vector<4x8x8xf32>
    %c3_97 = arith.constant 3 : index
    %c0_98 = arith.constant 0 : index
    %c0_99 = arith.constant 0 : index
    %136 = vector.load %arg6[%c3_97, %c0_98, %c0_99] : memref<4x32x8xf32, #tpu.memory_space<vmem>>, vector<1x32x8xf32>
    %137 = vector.shape_cast %136 : vector<1x32x8xf32> to vector<32x8xf32>
    %cst_100 = arith.constant dense<0.000000e+00> : vector<32x8xf32>
    %138 = tpu.matmul %2, %137, %cst_100 {dimension_numbers = #tpu.dot_dimension_numbers<[1], [0], [0], [1], [0, 0, 1, 1], [], []>} : vector<32x32xf32>, vector<32x8xf32>, vector<32x8xf32> -> vector<32x8xf32>
    %c3_101 = arith.constant 3 : index
    %c0_102 = arith.constant 0 : index
    %c0_103 = arith.constant 0 : index
    %139 = vector.load %arg9[%c3_101, %c0_102, %c0_103] : memref<4x1x8xf32, #tpu.memory_space<vmem>>, vector<1x1x8xf32>
    %140 = vector.shape_cast %139 : vector<1x1x8xf32> to vector<1x8xf32>
    %141 = vector.broadcast %140 : vector<1x8xf32> to vector<32x8xf32>
    %142 = arith.addf %138, %141 : vector<32x8xf32>
    %143 = vector.shape_cast %142 : vector<32x8xf32> to vector<4x8x8xf32>
    "tpu.trace_start"() <{level = 10 : i32, message = "bqd,bkd->bqk"}> : () -> ()
    %cst_104 = arith.constant dense<0.000000e+00> : vector<4x8x8xf32>
    %144 = tpu.matmul %127, %135, %cst_104 {dimension_numbers = #tpu.dot_dimension_numbers<[2], [2], [1], [1], [0, 0, 0, 1, 1, 1], [0], [0]>} : vector<4x8x8xf32>, vector<4x8x8xf32>, vector<4x8x8xf32> -> vector<4x8x8xf32>
    "tpu.trace_stop"() : () -> ()
    %cst_105 = arith.constant 0.176776692 : f32
    %145 = vector.broadcast %cst_105 : f32 to vector<4x8x8xf32>
    %146 = arith.mulf %144, %145 : vector<4x8x8xf32>
    %cst_106 = arith.constant dense<0xFF800000> : vector<4x8xf32>
    %147 = vector.multi_reduction <maximumf>, %146, %cst_106 [2] : vector<4x8x8xf32> to vector<4x8xf32>
    %148 = vector.shape_cast %147 : vector<4x8xf32> to vector<4x8x1xf32>
    %149 = vector.broadcast %148 : vector<4x8x1xf32> to vector<4x8x8xf32>
    %150 = arith.subf %146, %149 : vector<4x8x8xf32>
    %151 = math.exp %150 : vector<4x8x8xf32>
    %cst_107 = arith.constant dense<0.000000e+00> : vector<4x8xf32>
    %152 = vector.multi_reduction <add>, %151, %cst_107 [2] : vector<4x8x8xf32> to vector<4x8xf32>
    %153 = vector.shape_cast %152 : vector<4x8xf32> to vector<4x8x1xf32>
    %154 = vector.broadcast %153 : vector<4x8x1xf32> to vector<4x8x8xf32>
    %155 = arith.divf %151, %154 : vector<4x8x8xf32>
    "tpu.trace_start"() <{level = 10 : i32, message = "bqk,bkd->bqd"}> : () -> ()
    %cst_108 = arith.constant dense<0.000000e+00> : vector<4x8x8xf32>
    %156 = tpu.matmul %155, %143, %cst_108 {dimension_numbers = #tpu.dot_dimension_numbers<[2], [1], [1], [2], [0, 0, 0, 1, 1, 2], [0], [0]>} : vector<4x8x8xf32>, vector<4x8x8xf32>, vector<4x8x8xf32> -> vector<4x8x8xf32>
    "tpu.trace_stop"() : () -> ()
    %157 = vector.shape_cast %156 : vector<4x8x8xf32> to vector<32x8xf32>
    %c0_109 = arith.constant 0 : index
    %c24 = arith.constant 24 : index
    %158 = vector.load %arg10[%c0_109, %c24] : memref<32x32xf32, #tpu.memory_space<vmem>>, vector<32x8xf32>
    tpu.vector_store %arg10[%c0_109, %c24], %157 {strides = array<i32>} : memref<32x32xf32, #tpu.memory_space<vmem>>, vector<32x8xf32>,
    return
  }
  func.func @transform_0(%arg0: i32) -> (i32, i32) {
    %c0_i32 = arith.constant 0 : i32
    %c0_i32_0 = arith.constant 0 : i32
    return %arg0, %c0_i32 : i32, i32
  }
  func.func @transform_1(%arg0: i32) -> (i32, i32) {
    %c0_i32 = arith.constant 0 : i32
    %c0_i32_0 = arith.constant 0 : i32
    return %arg0, %c0_i32 : i32, i32
  }
  func.func @transform_2(%arg0: i32) -> (i32, i32) {
    %c0_i32 = arith.constant 0 : i32
    %c0_i32_0 = arith.constant 0 : i32
    return %arg0, %c0_i32 : i32, i32
  }
  func.func @transform_3(%arg0: i32) -> (i32, i32, i32) {
    %c0_i32 = arith.constant 0 : i32
    %c0_i32_0 = arith.constant 0 : i32
    %c0_i32_1 = arith.constant 0 : i32
    %c0_i32_2 = arith.constant 0 : i32
    return %c0_i32, %c0_i32_0, %c0_i32_1 : i32, i32, i32
  }
  func.func @transform_4(%arg0: i32) -> (i32, i32, i32) {
    %c0_i32 = arith.constant 0 : i32
    %c0_i32_0 = arith.constant 0 : i32
    %c0_i32_1 = arith.constant 0 : i32
    %c0_i32_2 = arith.constant 0 : i32
    return %c0_i32, %c0_i32_0, %c0_i32_1 : i32, i32, i32
  }
  func.func @transform_5(%arg0: i32) -> (i32, i32, i32) {
    %c0_i32 = arith.constant 0 : i32
    %c0_i32_0 = arith.constant 0 : i32
    %c0_i32_1 = arith.constant 0 : i32
    %c0_i32_2 = arith.constant 0 : i32
    return %c0_i32, %c0_i32_0, %c0_i32_1 : i32, i32, i32
  }
  func.func @transform_6(%arg0: i32) -> (i32, i32, i32) {
    %c0_i32 = arith.constant 0 : i32
    %c0_i32_0 = arith.constant 0 : i32
    %c0_i32_1 = arith.constant 0 : i32
    %c0_i32_2 = arith.constant 0 : i32
    return %c0_i32, %c0_i32_0, %c0_i32_1 : i32, i32, i32
  }
  func.func @transform_7(%arg0: i32) -> (i32, i32, i32) {
    %c0_i32 = arith.constant 0 : i32
    %c0_i32_0 = arith.constant 0 : i32
    %c0_i32_1 = arith.constant 0 : i32
    %c0_i32_2 = arith.constant 0 : i32
    return %c0_i32, %c0_i32_0, %c0_i32_1 : i32, i32, i32
  }
  func.func @transform_8(%arg0: i32) -> (i32, i32, i32) {
    %c0_i32 = arith.constant 0 : i32
    %c0_i32_0 = arith.constant 0 : i32
    %c0_i32_1 = arith.constant 0 : i32
    %c0_i32_2 = arith.constant 0 : i32
    return %c0_i32, %c0_i32_0, %c0_i32_1 : i32, i32, i32
  }
  func.func @transform_9(%arg0: i32) -> (i32, i32) {
    %c0_i32 = arith.constant 0 : i32
    %c0_i32_0 = arith.constant 0 : i32
    return %arg0, %c0_i32 : i32, i32
  }
}

</mosaic_0001>

<llo_original>
// kernel: tpu_custom_call.1
$region0: #{tpu_custom_call.1}
  #allocation0 [shape = 'u32[]', space=smem, size = 0x4, offset = 0x4, fixed_abs, tag = 'smem constant byte address 0x4 - core index']
  #allocation1 [shape = 'u32[72,128]{1,0:T(1,128)}', space=vmem, size = 0x9000, scoped, tag = 'internal scratch']
  %s0 = inlined_call_operand.vmem [shape: f32[64,32], index: 0, kind: input, shape index: {}]
  %s1 = inlined_call_operand.vmem [shape: f32[64,32], index: 1, kind: input, shape index: {}]
  %s2 = inlined_call_operand.vmem [shape: f32[64,32], index: 2, kind: input, shape index: {}]
  %s3 = inlined_call_operand.vmem [shape: f32[4,32,8], index: 3, kind: input, shape index: {}]
  %s4 = inlined_call_operand.vmem [shape: f32[4,32,8], index: 4, kind: input, shape index: {}]
  %s5 = inlined_call_operand.vmem [shape: f32[4,32,8], index: 5, kind: input, shape index: {}]
  %s6 = inlined_call_operand.vmem [shape: f32[4,1,8], index: 6, kind: input, shape index: {}]
  %s7 = inlined_call_operand.vmem [shape: f32[4,1,8], index: 7, kind: input, shape index: {}]
  %s8 = inlined_call_operand.vmem [shape: f32[4,1,8], index: 8, kind: input, shape index: {}]
  %s9 = inlined_call_operand.vmem [shape: f32[64,32], index: 9, kind: output, shape index: {}]
  %s10 = sld [smem:[#allocation0]]
  $region69: #{tpu_custom_call.1} parent=0
    _
  %s12 = ssub.s32 1, %s10
  %s13 = scalar_select 0, %s12, %s10
  loop: start=0, step=1, limit=4
  $region2: #{tpu_custom_call.1} parent=0 // loop_pre_header
    _
  $region3: #{tpu_custom_call.1} parent=0 // loop_header
    %s15 = sphi 0, %s19
    %p16 = scmp.ge.s32.totalorder %s15, 4
    %s25 = sphi 0, %s27
    %s28 = sphi 0, %s25
    %s29 = sphi 0, %s28
    %s45 = sphi 0, %s29
    %s51 = sphi 0, %s53
    %s54 = sphi 0, %s51
    %s55 = sphi 0, %s54
    %s71 = sphi 0, %s55
    %s77 = sphi 0, %s79
    %s80 = sphi 0, %s77
    %s81 = sphi 0, %s80
    %s97 = sphi 0, %s81
    %s101 = sphi 0, %s101
    %s103 = sphi 0, %s101
    %s104 = sphi 0, %s103
    %s118 = sphi 0, %s104
    %s122 = sphi 0, %s122
    %s124 = sphi 0, %s122
    %s125 = sphi 0, %s124
    %s139 = sphi 0, %s125
    %s143 = sphi 0, %s143
    %s145 = sphi 0, %s143
    %s146 = sphi 0, %s145
    %s160 = sphi 0, %s146
    %s164 = sphi 0, %s164
    %s166 = sphi 0, %s164
    %s167 = sphi 0, %s166
    %s181 = sphi 0, %s167
    %s185 = sphi 0, %s185
    %s187 = sphi 0, %s185
    %s188 = sphi 0, %s187
    %s202 = sphi 0, %s188
    %s206 = sphi 0, %s206
    %s208 = sphi 0, %s206
    %s209 = sphi 0, %s208
    %s223 = sphi 0, %s209
    %s229 = sphi 0, %s231
    %s232 = sphi 0, %s229
    %s233 = sphi 0, %s232
    %s249 = sphi 0, %s233
  $region4: #{tpu_custom_call.1} parent=0 // loop_header_branch
    %18 = sbr.rel (%p16) target = $region8
  $region5: #{tpu_custom_call.1} parent=0 // loop_body
    %s20 = ssub.s32 %s15, 1
    %s21 = ssub.s32 %s15, 2
    %s22 = sadd.s32 %s15, 1
    %s23 = ssub.s32 %s15, %s22
    %p24 = scmp.eq.s32.totalorder %s23, 0
    %s26 = sadd.s32 %s25, 1
    %s27 = scalar_select %p24, %s25, %s26
    %p30 = pneg %p24
    %p31 = scmp.eq.s32.totalorder %s15, 1
    %p32 = por %p30, %p31
    %p33 = scmp.ne.s32.totalorder %s25, %s28
    %p34 = scmp.eq.s32.totalorder %s15, 0
    %p35 = por %p33, %p34
    %p36 = scmp.ne.s32.totalorder %s25, %s28
    %p37 = scmp.eq.s32.totalorder %s20, 1
    %p38 = por %p36, %p37
    %p39 = scmp.ne.s32.totalorder %s28, %s29
    %p40 = scmp.eq.s32.totalorder %s20, 0
    %p41 = por %p39, %p40
    %p42 = scmp.ne.s32.totalorder %s28, %s29
    %p43 = scmp.eq.s32.totalorder %s21, 1
    %p44 = por %p42, %p43
    %p46 = scmp.ne.s32.totalorder %s29, %s45
    %p47 = scmp.eq.s32.totalorder %s21, 0
    %p48 = por %p46, %p47
    %s49 = ssub.s32 %s15, %s22
    %p50 = scmp.eq.s32.totalorder %s49, 0
    %s52 = sadd.s32 %s51, 1
    %s53 = scalar_select %p50, %s51, %s52
    %p56 = pneg %p50
    %p57 = scmp.eq.s32.totalorder %s15, 1
    %p58 = por %p56, %p57
    %p59 = scmp.ne.s32.totalorder %s51, %s54
    %p60 = scmp.eq.s32.totalorder %s15, 0
    %p61 = por %p59, %p60
    %p62 = scmp.ne.s32.totalorder %s51, %s54
    %p63 = scmp.eq.s32.totalorder %s20, 1
    %p64 = por %p62, %p63
    %p65 = scmp.ne.s32.totalorder %s54, %s55
    %p66 = scmp.eq.s32.totalorder %s20, 0
    %p67 = por %p65, %p66
    %p68 = scmp.ne.s32.totalorder %s54, %s55
    %p69 = scmp.eq.s32.totalorder %s21, 1
    %p70 = por %p68, %p69
    %p72 = scmp.ne.s32.totalorder %s55, %s71
    %p73 = scmp.eq.s32.totalorder %s21, 0
    %p74 = por %p72, %p73
    %s75 = ssub.s32 %s15, %s22
    %p76 = scmp.eq.s32.totalorder %s75, 0
    %s78 = sadd.s32 %s77, 1
    %s79 = scalar_select %p76, %s77, %s78
    %p82 = pneg %p76
    %p83 = scmp.eq.s32.totalorder %s15, 1
    %p84 = por %p82, %p83
    %p85 = scmp.ne.s32.totalorder %s77, %s80
    %p86 = scmp.eq.s32.totalorder %s15, 0
    %p87 = por %p85, %p86
    %p88 = scmp.ne.s32.totalorder %s77, %s80
    %p89 = scmp.eq.s32.totalorder %s20, 1
    %p90 = por %p88, %p89
    %p91 = scmp.ne.s32.totalorder %s80, %s81
    %p92 = scmp.eq.s32.totalorder %s20, 0
    %p93 = por %p91, %p92
    %p94 = scmp.ne.s32.totalorder %s80, %s81
    %p95 = scmp.eq.s32.totalorder %s21, 1
    %p96 = por %p94, %p95
    %p98 = scmp.ne.s32.totalorder %s81, %s97
    %p99 = scmp.eq.s32.totalorder %s21, 0
    %p100 = por %p98, %p99
    %s102 = sadd.s32 %s101, 1
    %p105 = scmp.eq.s32.totalorder %s15, 1
    %p106 = scmp.ne.s32.totalorder %s101, %s103
    %p107 = scmp.eq.s32.totalorder %s15, 0
    %p108 = por %p106, %p107
    %p109 = scmp.ne.s32.totalorder %s101, %s103
    %p110 = scmp.eq.s32.totalorder %s20, 1
    %p111 = por %p109, %p110
    %p112 = scmp.ne.s32.totalorder %s103, %s104
    %p113 = scmp.eq.s32.totalorder %s20, 0
    %p114 = por %p112, %p113
    %p115 = scmp.ne.s32.totalorder %s103, %s104
    %p116 = scmp.eq.s32.totalorder %s21, 1
    %p117 = por %p115, %p116
    %p119 = scmp.ne.s32.totalorder %s104, %s118
    %p120 = scmp.eq.s32.totalorder %s21, 0
    %p121 = por %p119, %p120
    %s123 = sadd.s32 %s122, 1
    %p126 = scmp.eq.s32.totalorder %s15, 1
    %p127 = scmp.ne.s32.totalorder %s122, %s124
    %p128 = scmp.eq.s32.totalorder %s15, 0
    %p129 = por %p127, %p128
    %p130 = scmp.ne.s32.totalorder %s122, %s124
    %p131 = scmp.eq.s32.totalorder %s20, 1
    %p132 = por %p130, %p131
    %p133 = scmp.ne.s32.totalorder %s124, %s125
    %p134 = scmp.eq.s32.totalorder %s20, 0
    %p135 = por %p133, %p134
    %p136 = scmp.ne.s32.totalorder %s124, %s125
    %p137 = scmp.eq.s32.totalorder %s21, 1
    %p138 = por %p136, %p137
    %p140 = scmp.ne.s32.totalorder %s125, %s139
    %p141 = scmp.eq.s32.totalorder %s21, 0
    %p142 = por %p140, %p141
    %s144 = sadd.s32 %s143, 1
    %p147 = scmp.eq.s32.totalorder %s15, 1
    %p148 = scmp.ne.s32.totalorder %s143, %s145
    %p149 = scmp.eq.s32.totalorder %s15, 0
    %p150 = por %p148, %p149
    %p151 = scmp.ne.s32.totalorder %s143, %s145
    %p152 = scmp.eq.s32.totalorder %s20, 1
    %p153 = por %p151, %p152
    %p154 = scmp.ne.s32.totalorder %s145, %s146
    %p155 = scmp.eq.s32.totalorder %s20, 0
    %p156 = por %p154, %p155
    %p157 = scmp.ne.s32.totalorder %s145, %s146
    %p158 = scmp.eq.s32.totalorder %s21, 1
    %p159 = por %p157, %p158
    %p161 = scmp.ne.s32.totalorder %s146, %s160
    %p162 = scmp.eq.s32.totalorder %s21, 0
    %p163 = por %p161, %p162
    %s165 = sadd.s32 %s164, 1
    %p168 = scmp.eq.s32.totalorder %s15, 1
    %p169 = scmp.ne.s32.totalorder %s164, %s166
    %p170 = scmp.eq.s32.totalorder %s15, 0
    %p171 = por %p169, %p170
    %p172 = scmp.ne.s32.totalorder %s164, %s166
    %p173 = scmp.eq.s32.totalorder %s20, 1
    %p174 = por %p172, %p173
    %p175 = scmp.ne.s32.totalorder %s166, %s167
    %p176 = scmp.eq.s32.totalorder %s20, 0
    %p177 = por %p175, %p176
    %p178 = scmp.ne.s32.totalorder %s166, %s167
    %p179 = scmp.eq.s32.totalorder %s21, 1
    %p180 = por %p178, %p179
    %p182 = scmp.ne.s32.totalorder %s167, %s181
    %p183 = scmp.eq.s32.totalorder %s21, 0
    %p184 = por %p182, %p183
    %s186 = sadd.s32 %s185, 1
    %p189 = scmp.eq.s32.totalorder %s15, 1
    %p190 = scmp.ne.s32.totalorder %s185, %s187
    %p191 = scmp.eq.s32.totalorder %s15, 0
    %p192 = por %p190, %p191
    %p193 = scmp.ne.s32.totalorder %s185, %s187
    %p194 = scmp.eq.s32.totalorder %s20, 1
    %p195 = por %p193, %p194
    %p196 = scmp.ne.s32.totalorder %s187, %s188
    %p197 = scmp.eq.s32.totalorder %s20, 0
    %p198 = por %p196, %p197
    %p199 = scmp.ne.s32.totalorder %s187, %s188
    %p200 = scmp.eq.s32.totalorder %s21, 1
    %p201 = por %p199, %p200
    %p203 = scmp.ne.s32.totalorder %s188, %s202
    %p204 = scmp.eq.s32.totalorder %s21, 0
    %p205 = por %p203, %p204
    %s207 = sadd.s32 %s206, 1
    %p210 = scmp.eq.s32.totalorder %s15, 1
    %p211 = scmp.ne.s32.totalorder %s206, %s208
    %p212 = scmp.eq.s32.totalorder %s15, 0
    %p213 = por %p211, %p212
    %p214 = scmp.ne.s32.totalorder %s206, %s208
    %p215 = scmp.eq.s32.totalorder %s20, 1
    %p216 = por %p214, %p215
    %p217 = scmp.ne.s32.totalorder %s208, %s209
    %p218 = scmp.eq.s32.totalorder %s20, 0
    %p219 = por %p217, %p218
    %p220 = scmp.ne.s32.totalorder %s208, %s209
    %p221 = scmp.eq.s32.totalorder %s21, 1
    %p222 = por %p220, %p221
    %p224 = scmp.ne.s32.totalorder %s209, %s223
    %p225 = scmp.eq.s32.totalorder %s21, 0
    %p226 = por %p224, %p225
    %s227 = ssub.s32 %s15, %s22
    %p228 = scmp.eq.s32.totalorder %s227, 0
    %s230 = sadd.s32 %s229, 1
    %s231 = scalar_select %p228, %s229, %s230
    %p234 = pneg %p228
    %p235 = scmp.eq.s32.totalorder %s15, 1
    %p236 = por %p234, %p235
    %p237 = scmp.ne.s32.totalorder %s229, %s232
    %p238 = scmp.eq.s32.totalorder %s15, 0
    %p239 = por %p237, %p238
    %p240 = scmp.ne.s32.totalorder %s229, %s232
    %p241 = scmp.eq.s32.totalorder %s20, 1
    %p242 = por %p240, %p241
    %p243 = scmp.ne.s32.totalorder %s232, %s233
    %p244 = scmp.eq.s32.totalorder %s20, 0
    %p245 = por %p243, %p244
    %p246 = scmp.ne.s32.totalorder %s232, %s233
    %p247 = scmp.eq.s32.totalorder %s21, 1
    %p248 = por %p246, %p247
    %p250 = scmp.ne.s32.totalorder %s233, %s249
    %p251 = scmp.eq.s32.totalorder %s21, 0
    %p252 = por %p250, %p251
    %p253 = scmp.le.s32.totalorder 1, %s15
    %p254 = scmp.lt.s32.totalorder %s15, 3
    %p255 = pnand %p253, %p254
    %p256 = pneg %p255
    // Predicated region
    $region9: #{tpu_custom_call.1} parent=5 // pred_check
      _
    $region10: #{tpu_custom_call.1} parent=5 // pred_check_branch
      %258 = sbr.rel (%p255) target = $region12
    $region11: #{tpu_custom_call.1} parent=5 // pred_region
      %s259 = ssub.s32 %s15, 1
      // Predicated region
      $region13: #{tpu_custom_call.1} parent=11 // pred_check
        %p260 = pneg %p114
      $region14: #{tpu_custom_call.1} parent=11 // pred_check_branch
        %262 = sbr.rel (%p260) target = $region16
      $region15: #{tpu_custom_call.1} parent=11 // pred_region
        _
      $region16: #{tpu_custom_call.1} parent=11 // pred_fallthru
        _
      // Predicated region
      $region17: #{tpu_custom_call.1} parent=11 // pred_check
        %p263 = pneg %p135
      $region18: #{tpu_custom_call.1} parent=11 // pred_check_branch
        %265 = sbr.rel (%p263) target = $region20
      $region19: #{tpu_custom_call.1} parent=11 // pred_region
        _
      $region20: #{tpu_custom_call.1} parent=11 // pred_fallthru
        _
      // Predicated region
      $region21: #{tpu_custom_call.1} parent=11 // pred_check
        %p266 = pneg %p156
      $region22: #{tpu_custom_call.1} parent=11 // pred_check_branch
        %268 = sbr.rel (%p266) target = $region24
      $region23: #{tpu_custom_call.1} parent=11 // pred_region
        _
      $region24: #{tpu_custom_call.1} parent=11 // pred_fallthru
        _
      // Predicated region
      $region25: #{tpu_custom_call.1} parent=11 // pred_check
        %p269 = pneg %p177
      $region26: #{tpu_custom_call.1} parent=11 // pred_check_branch
        %271 = sbr.rel (%p269) target = $region28
      $region27: #{tpu_custom_call.1} parent=11 // pred_region
        _
      $region28: #{tpu_custom_call.1} parent=11 // pred_fallthru
        _
      // Predicated region
      $region29: #{tpu_custom_call.1} parent=11 // pred_check
        %p272 = pneg %p198
      $region30: #{tpu_custom_call.1} parent=11 // pred_check_branch
        %274 = sbr.rel (%p272) target = $region32
      $region31: #{tpu_custom_call.1} parent=11 // pred_region
        _
      $region32: #{tpu_custom_call.1} parent=11 // pred_fallthru
        _
      // Predicated region
      $region33: #{tpu_custom_call.1} parent=11 // pred_check
        %p275 = pneg %p219
      $region34: #{tpu_custom_call.1} parent=11 // pred_check_branch
        %277 = sbr.rel (%p275) target = $region36
      $region35: #{tpu_custom_call.1} parent=11 // pred_region
        _
      $region36: #{tpu_custom_call.1} parent=11 // pred_fallthru
        _
    $region12: #{tpu_custom_call.1} parent=5 // pred_fallthru
      _
    %p278 = scmp.lt.s32.totalorder %s15, 2
    // Predicated region
    $region37: #{tpu_custom_call.1} parent=5 // pred_check
      %p279 = pneg %p278
    $region38: #{tpu_custom_call.1} parent=5 // pred_check_branch
      %281 = sbr.rel (%p279) target = $region40
    $region39: #{tpu_custom_call.1} parent=5 // pred_region
      // Predicated region
      $region41: #{tpu_custom_call.1} parent=39 // pred_check
        %p282 = pneg %p35
      $region42: #{tpu_custom_call.1} parent=39 // pred_check_branch
        %284 = sbr.rel (%p282) target = $region44
      $region43: #{tpu_custom_call.1} parent=39 // pred_region
        %s285 = smul.u32 4, %s15
        %p286 = scmp.lt.s32.totalorder %s285, 7
        %s287 = scalar_select %p286, %s285, 7
        %s288 = smul.addr %s287, 8
        %s289 = scalar_lea.vmem %s0, %s288
        %s290 = smul.u32 4, %s15
      $region44: #{tpu_custom_call.1} parent=39 // pred_fallthru
        _
      // Predicated region
      $region45: #{tpu_custom_call.1} parent=39 // pred_check
        %p291 = pneg %p61
      $region46: #{tpu_custom_call.1} parent=39 // pred_check_branch
        %293 = sbr.rel (%p291) target = $region48
      $region47: #{tpu_custom_call.1} parent=39 // pred_region
        %s294 = smul.u32 4, %s15
        %p295 = scmp.lt.s32.totalorder %s294, 7
        %s296 = scalar_select %p295, %s294, 7
        %s297 = smul.addr %s296, 8
        %s298 = scalar_lea.vmem %s1, %s297
        %s299 = smul.u32 4, %s15
      $region48: #{tpu_custom_call.1} parent=39 // pred_fallthru
        _
      // Predicated region
      $region49: #{tpu_custom_call.1} parent=39 // pred_check
        %p300 = pneg %p87
      $region50: #{tpu_custom_call.1} parent=39 // pred_check_branch
        %302 = sbr.rel (%p300) target = $region52
      $region51: #{tpu_custom_call.1} parent=39 // pred_region
        %s303 = smul.u32 4, %s15
        %p304 = scmp.lt.s32.totalorder %s303, 7
        %s305 = scalar_select %p304, %s303, 7
        %s306 = smul.addr %s305, 8
        %s307 = scalar_lea.vmem %s2, %s306
        %s308 = smul.u32 4, %s15
      $region52: #{tpu_custom_call.1} parent=39 // pred_fallthru
        _
    $region40: #{tpu_custom_call.1} parent=5 // pred_fallthru
      _
    %p309 = scmp.le.s32.totalorder 1, %s15
    %p310 = scmp.lt.s32.totalorder %s15, 3
    %p311 = pnand %p309, %p310
    %p312 = pneg %p311
    // Predicated region
    $region53: #{tpu_custom_call.1} parent=5 // pred_check
      _
    $region54: #{tpu_custom_call.1} parent=5 // pred_check_branch
      %314 = sbr.rel (%p311) target = $region56
    $region55: #{tpu_custom_call.1} parent=5 // pred_region
      %s315 = ssub.s32 %s15, 1
      %s316 = smul.u32 4, %s20
      %p317 = scmp.lt.s32.totalorder %s316, 7
      %s318 = scalar_select %p317, %s316, 7
      %s319 = smul.addr %s318, 8
      %s320 = scalar_lea.vmem %s0, %s319
      %p321 = pneg %p41
      %p322 = pneg %p38
      %s323 = smul.u32 4, %s20
      %p324 = scmp.lt.s32.totalorder %s323, 7
      %s325 = scalar_select %p324, %s323, 7
      %s326 = smul.addr %s325, 8
      %s327 = scalar_lea.vmem %s1, %s326
      %p328 = pneg %p67
      %p329 = pneg %p64
      %s330 = smul.u32 4, %s20
      %p331 = scmp.lt.s32.totalorder %s330, 7
      %s332 = scalar_select %p331, %s330, 7
      %s333 = smul.addr %s332, 8
      %s334 = scalar_lea.vmem %s2, %s333
      %p335 = pneg %p93
      %p336 = pneg %p90
      %p337 = pneg %p114
      %p338 = pneg %p111
      %p339 = pneg %p135
      %p340 = pneg %p132
      %p341 = pneg %p156
      %p342 = pneg %p153
      %p343 = pneg %p177
      %p344 = pneg %p174
      %p345 = pneg %p198
      %p346 = pneg %p195
      %p347 = pneg %p219
      %p348 = pneg %p216
      %p349 = pneg %p245
      %p350 = pneg %p242
      %s351 = smul.u32 4, %s20
      %p352 = scmp.lt.s32.totalorder %s351, 7
      %s353 = scalar_select %p352, %s351, 7
      %s354 = smul.addr %s353, 8
      %s355 = scalar_lea.vmem %s9, %s354
      %s356 = smul.u32 4, %s20
      %p357 = scmp.lt.s32.totalorder %s356, 7
      %s358 = scalar_select %p357, %s356, 7
      %s359 = smul.addr %s358, 8
      %s360 = scalar_lea.vmem %s0, %s359
      %s361 = smul.u32 4, %s20
      %s362 = smul.u32 4, %s20
      %p363 = scmp.lt.s32.totalorder %s362, 7
      %s364 = scalar_select %p363, %s362, 7
      %s365 = smul.addr %s364, 8
      %s366 = scalar_lea.vmem %s1, %s365
      %s367 = smul.u32 4, %s20
      %s368 = smul.u32 4, %s20
      %p369 = scmp.lt.s32.totalorder %s368, 7
      %s370 = scalar_select %p369, %s368, 7
      %s371 = smul.addr %s370, 8
      %s372 = scalar_lea.vmem %s2, %s371
      %s373 = smul.u32 4, %s20
      %s374 = smul.u32 4, %s20
      %p375 = scmp.lt.s32.totalorder %s374, 7
      %s376 = scalar_select %p375, %s374, 7
      %s377 = smul.addr %s376, 8
      %s378 = scalar_lea.vmem %s9, %s377
      %s379 = smul.u32 4, %s20
      %v380 = vld [vmem:[%s360] sm:$0xff]
      %v381 = vld [vmem:[%s360 + $0x8] sm:$0xff]
      %v382 = vld [vmem:[%s360 + $0x10] sm:$0xff]
      %v383 = vld [vmem:[%s360 + $0x18] sm:$0xff]
      %v384 = vld [vmem:[%s366] sm:$0xff]
      %v385 = vld [vmem:[%s366 + $0x8] sm:$0xff]
      %v386 = vld [vmem:[%s366 + $0x10] sm:$0xff]
      %v387 = vld [vmem:[%s366 + $0x18] sm:$0xff]
      %v388 = vld [vmem:[%s372] sm:$0xff]
      %v389 = vld [vmem:[%s372 + $0x8] sm:$0xff]
      %v390 = vld [vmem:[%s372 + $0x10] sm:$0xff]
      %v391 = vld [vmem:[%s372 + $0x18] sm:$0xff]
      %v392 = vld [vmem:[%s3] sm:$0xff]
      %v393 = vld [vmem:[%s3 + $0x8] sm:$0xff]
      %v394 = vld [vmem:[%s3 + $0x10] sm:$0xff]
      %v395 = vld [vmem:[%s3 + $0x18] sm:$0xff]
      %v396 = vld [vmem:[%s6] sm:$0x1]
      %v398 = vperm.slane %v396, 0
      %vm400 = vcmask 261120
      %v402 = vsel %vm400, %v380, 0
      %v405 = vsel %vm400, %v381, 0
      %v408 = vsel %vm400, %v382, 0
      %v411 = vsel %vm400, %v383, 0
      %413 = vmatpush.msra.mxu0 0.0
      %414 = vmatpush.msra.mxu0 0.0
      %415 = vmatpush.msra.mxu0 0.0
      %416 = vmatpush.msra.mxu0 0.0
      %417 = vmatpush.msra.mxu0 0.0
      %418 = vmatpush.msra.mxu0 0.0
      %419 = vmatpush.msra.mxu0 0.0
      %420 = vmatpush.msra.mxu0 0.0
      %421 = vmatpush.msra.mxu0 0.0
      %422 = vmatpush.msra.mxu0 0.0
      %423 = vmatpush.msra.mxu0 0.0
      %424 = vmatpush.msra.mxu0 0.0
      %425 = vmatpush.msra.mxu0 %v395
      %426 = vmatpush.msra.mxu0 %v394
      %427 = vmatpush.msra.mxu0 %v393
      %428 = vmatpush.msra.mxu0 %v392
      %429 = vmatmul.f32.gmra.mxu0 %v402
      %v430 = vpop.f32.mrf.mxu0
      %v431 = vadd.f32 %v398, %v430
      %432 = vmatmul.f32.gmra.mxu0 %v405
      %v433 = vpop.f32.mrf.mxu0
      %v434 = vadd.f32 %v398, %v433
      %435 = vmatmul.f32.gmra.mxu0 %v408
      %v436 = vpop.f32.mrf.mxu0
      %v437 = vadd.f32 %v398, %v436
      %438 = vmatmul.f32.gmra.mxu0 %v411
      %v439 = vpop.f32.mrf.mxu0
      %v440 = vadd.f32 %v398, %v439
      %441 = vdwg.mxu0
      %v442 = vld [vmem:[%s4] sm:$0xff]
      %v443 = vld [vmem:[%s4 + $0x8] sm:$0xff]
      %v444 = vld [vmem:[%s4 + $0x10] sm:$0xff]
      %v445 = vld [vmem:[%s4 + $0x18] sm:$0xff]
      %v446 = vld [vmem:[%s7] sm:$0x1]
      %v448 = vperm.slane %v446, 0
      %v451 = vsel %vm400, %v384, 0
      %v454 = vsel %vm400, %v385, 0
      %v457 = vsel %vm400, %v386, 0
      %v460 = vsel %vm400, %v387, 0
      %462 = vmatpush.msra.mxu0 0.0
      %463 = vmatpush.msra.mxu0 0.0
      %464 = vmatpush.msra.mxu0 0.0
      %465 = vmatpush.msra.mxu0 0.0
      %466 = vmatpush.msra.mxu0 0.0
      %467 = vmatpush.msra.mxu0 0.0
      %468 = vmatpush.msra.mxu0 0.0
      %469 = vmatpush.msra.mxu0 0.0
      %470 = vmatpush.msra.mxu0 0.0
      %471 = vmatpush.msra.mxu0 0.0
      %472 = vmatpush.msra.mxu0 0.0
      %473 = vmatpush.msra.mxu0 0.0
      %474 = vmatpush.msra.mxu0 %v445
      %475 = vmatpush.msra.mxu0 %v444
      %476 = vmatpush.msra.mxu0 %v443
      %477 = vmatpush.msra.mxu0 %v442
      %478 = vmatmul.f32.gmra.mxu0 %v451
      %v479 = vpop.f32.mrf.mxu0
      %v480 = vadd.f32 %v448, %v479
      %481 = vmatmul.f32.gmra.mxu0 %v454
      %v482 = vpop.f32.mrf.mxu0
      %v483 = vadd.f32 %v448, %v482
      %484 = vmatmul.f32.gmra.mxu0 %v457
      %v485 = vpop.f32.mrf.mxu0
      %v486 = vadd.f32 %v448, %v485
      %487 = vmatmul.f32.gmra.mxu0 %v460
      %v488 = vpop.f32.mrf.mxu0
      %v489 = vadd.f32 %v448, %v488
      %490 = vdwg.mxu0
      %v491 = vld [vmem:[%s5] sm:$0xff]
      %v492 = vld [vmem:[%s5 + $0x8] sm:$0xff]
      %v493 = vld [vmem:[%s5 + $0x10] sm:$0xff]
      %v494 = vld [vmem:[%s5 + $0x18] sm:$0xff]
      %v495 = vld [vmem:[%s8] sm:$0x1]
      %v497 = vperm.slane %v495, 0
      %v500 = vsel %vm400, %v388, 0
      %v503 = vsel %vm400, %v389, 0
      %v506 = vsel %vm400, %v390, 0
      %v509 = vsel %vm400, %v391, 0
      %511 = vmatpush.msra.mxu0 0.0
      %512 = vmatpush.msra.mxu0 0.0
      %513 = vmatpush.msra.mxu0 0.0
      %514 = vmatpush.msra.mxu0 0.0
      %515 = vmatpush.msra.mxu0 0.0
      %516 = vmatpush.msra.mxu0 0.0
      %517 = vmatpush.msra.mxu0 0.0
      %518 = vmatpush.msra.mxu0 0.0
      %519 = vmatpush.msra.mxu0 0.0
      %520 = vmatpush.msra.mxu0 0.0
      %521 = vmatpush.msra.mxu0 0.0
      %522 = vmatpush.msra.mxu0 0.0
      %523 = vmatpush.msra.mxu0 %v494
      %524 = vmatpush.msra.mxu0 %v493
      %525 = vmatpush.msra.mxu0 %v492
      %526 = vmatpush.msra.mxu0 %v491
      %527 = vmatmul.f32.gmra.mxu0 %v500
      %v528 = vpop.f32.mrf.mxu0
      %v529 = vadd.f32 %v497, %v528
      %530 = vmatmul.f32.gmra.mxu0 %v503
      %v531 = vpop.f32.mrf.mxu0
      %v532 = vadd.f32 %v497, %v531
      %533 = vmatmul.f32.gmra.mxu0 %v506
      %v534 = vpop.f32.mrf.mxu0
      %v535 = vadd.f32 %v497, %v534
      %536 = vmatmul.f32.gmra.mxu0 %v509
      %v537 = vpop.f32.mrf.mxu0
      %v538 = vadd.f32 %v497, %v537
      %539 = vdwg.mxu0
      %vm540 = vcmask 64512
      %v542 = vsel %vm540, %v431, 0
      %v545 = vsel %vm540, %v480, 0
      %547 = vmatpush.xpose.msra.mxu0 0.0
      %548 = vmatpush.xpose.msra.mxu0 0.0
      %549 = vmatpush.xpose.msra.mxu0 0.0
      %550 = vmatpush.xpose.msra.mxu0 0.0
      %551 = vmatpush.xpose.msra.mxu0 0.0
      %552 = vmatpush.xpose.msra.mxu0 0.0
      %553 = vmatpush.xpose.msra.mxu0 0.0
      %554 = vmatpush.xpose.msra.mxu0 0.0
      %555 = vmatpush.xpose.msra.mxu0 0.0
      %556 = vmatpush.xpose.msra.mxu0 0.0
      %557 = vmatpush.xpose.msra.mxu0 0.0
      %558 = vmatpush.xpose.msra.mxu0 0.0
      %559 = vmatpush.xpose.msra.mxu0 0.0
      %560 = vmatpush.xpose.msra.mxu0 0.0
      %561 = vmatpush.xpose.msra.mxu0 0.0
      %562 = vmatpush.xpose.msra.mxu0 %v545
      %563 = vmatmul.f32.gmra.mxu0 %v542
      %v564 = vpop.f32.mrf.mxu0
      %v565 = vadd.f32 0.0, %v564
      %566 = vdwg.mxu0
      %v568 = vsel %vm540, %v434, 0
      %v571 = vsel %vm540, %v483, 0
      %573 = vmatpush.xpose.msra.mxu0 0.0
      %574 = vmatpush.xpose.msra.mxu0 0.0
      %575 = vmatpush.xpose.msra.mxu0 0.0
      %576 = vmatpush.xpose.msra.mxu0 0.0
      %577 = vmatpush.xpose.msra.mxu0 0.0
      %578 = vmatpush.xpose.msra.mxu0 0.0
      %579 = vmatpush.xpose.msra.mxu0 0.0
      %580 = vmatpush.xpose.msra.mxu0 0.0
      %581 = vmatpush.xpose.msra.mxu0 0.0
      %582 = vmatpush.xpose.msra.mxu0 0.0
      %583 = vmatpush.xpose.msra.mxu0 0.0
      %584 = vmatpush.xpose.msra.mxu0 0.0
      %585 = vmatpush.xpose.msra.mxu0 0.0
      %586 = vmatpush.xpose.msra.mxu0 0.0
      %587 = vmatpush.xpose.msra.mxu0 0.0
      %588 = vmatpush.xpose.msra.mxu0 %v571
      %589 = vmatmul.f32.gmra.mxu0 %v568
      %v590 = vpop.f32.mrf.mxu0
      %v591 = vadd.f32 0.0, %v590
      %592 = vdwg.mxu0
      %v594 = vsel %vm540, %v437, 0
      %v597 = vsel %vm540, %v486, 0
      %599 = vmatpush.xpose.msra.mxu0 0.0
      %600 = vmatpush.xpose.msra.mxu0 0.0
      %601 = vmatpush.xpose.msra.mxu0 0.0
      %602 = vmatpush.xpose.msra.mxu0 0.0
      %603 = vmatpush.xpose.msra.mxu0 0.0
      %604 = vmatpush.xpose.msra.mxu0 0.0
      %605 = vmatpush.xpose.msra.mxu0 0.0
      %606 = vmatpush.xpose.msra.mxu0 0.0
      %607 = vmatpush.xpose.msra.mxu0 0.0
      %608 = vmatpush.xpose.msra.mxu0 0.0
      %609 = vmatpush.xpose.msra.mxu0 0.0
      %610 = vmatpush.xpose.msra.mxu0 0.0
      %611 = vmatpush.xpose.msra.mxu0 0.0
      %612 = vmatpush.xpose.msra.mxu0 0.0
      %613 = vmatpush.xpose.msra.mxu0 0.0
      %614 = vmatpush.xpose.msra.mxu0 %v597
      %615 = vmatmul.f32.gmra.mxu0 %v594
      %v616 = vpop.f32.mrf.mxu0
      %v617 = vadd.f32 0.0, %v616
      %618 = vdwg.mxu0
      %v620 = vsel %vm540, %v440, 0
      %v623 = vsel %vm540, %v489, 0
      %625 = vmatpush.xpose.msra.mxu0 0.0
      %626 = vmatpush.xpose.msra.mxu0 0.0
      %627 = vmatpush.xpose.msra.mxu0 0.0
      %628 = vmatpush.xpose.msra.mxu0 0.0
      %629 = vmatpush.xpose.msra.mxu0 0.0
      %630 = vmatpush.xpose.msra.mxu0 0.0
      %631 = vmatpush.xpose.msra.mxu0 0.0
      %632 = vmatpush.xpose.msra.mxu0 0.0
      %633 = vmatpush.xpose.msra.mxu0 0.0
      %634 = vmatpush.xpose.msra.mxu0 0.0
      %635 = vmatpush.xpose.msra.mxu0 0.0
      %636 = vmatpush.xpose.msra.mxu0 0.0
      %637 = vmatpush.xpose.msra.mxu0 0.0
      %638 = vmatpush.xpose.msra.mxu0 0.0
      %639 = vmatpush.xpose.msra.mxu0 0.0
      %640 = vmatpush.xpose.msra.mxu0 %v623
      %641 = vmatmul.f32.gmra.mxu0 %v620
      %v642 = vpop.f32.mrf.mxu0
      %v643 = vadd.f32 0.0, %v642
      %644 = vdwg.mxu0
      %v645 = vmul.f32 %v565, 0.17677669
      %v646 = vmul.f32 %v591, 0.17677669
      %v647 = vmul.f32 %v617, 0.17677669
      %v648 = vmul.f32 %v643, 0.17677669
      %v649 = vsel %vm540, %v645, -inf
      %650 = vmax.xlane.f32.xlu0 %v649
      %v651 = vpop.xlane.xlu0 %650
      %v652 = vsel %vm540, %v646, -inf
      %653 = vmax.xlane.f32.xlu0 %v652
      %v654 = vpop.xlane.xlu0 %653
      %v655 = vsel %vm540, %v647, -inf
      %656 = vmax.xlane.f32.xlu0 %v655
      %v657 = vpop.xlane.xlu0 %656
      %v658 = vsel %vm540, %v648, -inf
      %659 = vmax.xlane.f32.xlu0 %v658
      %v660 = vpop.xlane.xlu0 %659
      %v661 = vsub.f32 %v645, %v651
      %v662 = vsub.f32 %v646, %v654
      %v663 = vsub.f32 %v647, %v657
      %v664 = vsub.f32 %v648, %v660
      %v665 = vmul.f32 %v661, 1.442695
      %v666 = vpow.pop %v665
      %v667 = vmul.f32 %v662, 1.442695
      %v668 = vpow.pop %v667
      %v669 = vmul.f32 %v663, 1.442695
      %v670 = vpow.pop %v669
      %v671 = vmul.f32 %v664, 1.442695
      %v672 = vpow.pop %v671
      %v673 = vsel %vm540, %v666, 0.0
      %674 = vadd.xlane.f32.xlu0 %v673
      %v675 = vpop.xlane.xlu0 %674
      %v676 = vsel %vm540, %v668, 0.0
      %677 = vadd.xlane.f32.xlu0 %v676
      %v678 = vpop.xlane.xlu0 %677
      %v679 = vsel %vm540, %v670, 0.0
      %680 = vadd.xlane.f32.xlu0 %v679
      %v681 = vpop.xlane.xlu0 %680
      %v682 = vsel %vm540, %v672, 0.0
      %683 = vadd.xlane.f32.xlu0 %v682
      %v684 = vpop.xlane.xlu0 %683
      %v685 = vrcp.pop %v675
      %v686 = vmul.f32 %v675, %v685
      %v687 = vsub.f32 1.0, %v686
      %v688 = vmul.f32 %v685, %v687
      %v689 = vadd.f32 %v685, %v688
      %vm690 = vweird.f32 %v675
      %vm691 = vweird.f32 %v685
      %vm692 = vmor %vm690, %vm691
      %v693 = vsel %vm692, %v685, %v689
      %v694 = vand.u32 2147483647, %v675
      %vm695 = vcmp.eq.f32.partialorder %v694, 8.507059e+37
      %v696 = vand.u32 %v675, 2147483648
      %v697 = vor.u32 1.1754944e-38, %v696
      %v698 = vsel %vm695, %v697, %v693
      %v699 = vmul.f32 %v666, %v698
      %v700 = vrcp.pop %v678
      %v701 = vmul.f32 %v678, %v700
      %v702 = vsub.f32 1.0, %v701
      %v703 = vmul.f32 %v700, %v702
      %v704 = vadd.f32 %v700, %v703
      %vm705 = vweird.f32 %v678
      %vm706 = vweird.f32 %v700
      %vm707 = vmor %vm705, %vm706
      %v708 = vsel %vm707, %v700, %v704
      %v709 = vand.u32 2147483647, %v678
      %vm710 = vcmp.eq.f32.partialorder %v709, 8.507059e+37
      %v711 = vand.u32 %v678, 2147483648
      %v712 = vor.u32 1.1754944e-38, %v711
      %v713 = vsel %vm710, %v712, %v708
      %v714 = vmul.f32 %v668, %v713
      %v715 = vrcp.pop %v681
      %v716 = vmul.f32 %v681, %v715
      %v717 = vsub.f32 1.0, %v716
      %v718 = vmul.f32 %v715, %v717
      %v719 = vadd.f32 %v715, %v718
      %vm720 = vweird.f32 %v681
      %vm721 = vweird.f32 %v715
      %vm722 = vmor %vm720, %vm721
      %v723 = vsel %vm722, %v715, %v719
      %v724 = vand.u32 2147483647, %v681
      %vm725 = vcmp.eq.f32.partialorder %v724, 8.507059e+37
      %v726 = vand.u32 %v681, 2147483648
      %v727 = vor.u32 1.1754944e-38, %v726
      %v728 = vsel %vm725, %v727, %v723
      %v729 = vmul.f32 %v670, %v728
      %v730 = vrcp.pop %v684
      %v731 = vmul.f32 %v684, %v730
      %v732 = vsub.f32 1.0, %v731
      %v733 = vmul.f32 %v730, %v732
      %v734 = vadd.f32 %v730, %v733
      %vm735 = vweird.f32 %v684
      %vm736 = vweird.f32 %v730
      %vm737 = vmor %vm735, %vm736
      %v738 = vsel %vm737, %v730, %v734
      %v739 = vand.u32 2147483647, %v684
      %vm740 = vcmp.eq.f32.partialorder %v739, 8.507059e+37
      %v741 = vand.u32 %v684, 2147483648
      %v742 = vor.u32 1.1754944e-38, %v741
      %v743 = vsel %vm740, %v742, %v738
      %v744 = vmul.f32 %v672, %v743
      %v746 = vsel %vm540, %v699, 0
      %748 = vmatpush.msra.mxu0 0.0
      %749 = vmatpush.msra.mxu0 0.0
      %750 = vmatpush.msra.mxu0 0.0
      %751 = vmatpush.msra.mxu0 0.0
      %752 = vmatpush.msra.mxu0 0.0
      %753 = vmatpush.msra.mxu0 0.0
      %754 = vmatpush.msra.mxu0 0.0
      %755 = vmatpush.msra.mxu0 0.0
      %756 = vmatpush.msra.mxu0 0.0
      %757 = vmatpush.msra.mxu0 0.0
      %758 = vmatpush.msra.mxu0 0.0
      %759 = vmatpush.msra.mxu0 0.0
      %760 = vmatpush.msra.mxu0 0.0
      %761 = vmatpush.msra.mxu0 0.0
      %762 = vmatpush.msra.mxu0 0.0
      %763 = vmatpush.msra.mxu0 %v529
      %764 = vmatmul.f32.gmra.mxu0 %v746
      %v765 = vpop.f32.mrf.mxu0
      %v766 = vadd.f32 0.0, %v765
      %767 = vdwg.mxu0
      %v769 = vsel %vm540, %v714, 0
      %771 = vmatpush.msra.mxu0 0.0
      %772 = vmatpush.msra.mxu0 0.0
      %773 = vmatpush.msra.mxu0 0.0
      %774 = vmatpush.msra.mxu0 0.0
      %775 = vmatpush.msra.mxu0 0.0
      %776 = vmatpush.msra.mxu0 0.0
      %777 = vmatpush.msra.mxu0 0.0
      %778 = vmatpush.msra.mxu0 0.0
      %779 = vmatpush.msra.mxu0 0.0
      %780 = vmatpush.msra.mxu0 0.0
      %781 = vmatpush.msra.mxu0 0.0
      %782 = vmatpush.msra.mxu0 0.0
      %783 = vmatpush.msra.mxu0 0.0
      %784 = vmatpush.msra.mxu0 0.0
      %785 = vmatpush.msra.mxu0 0.0
      %786 = vmatpush.msra.mxu0 %v532
      %787 = vmatmul.f32.gmra.mxu0 %v769
      %v788 = vpop.f32.mrf.mxu0
      %v789 = vadd.f32 0.0, %v788
      %790 = vdwg.mxu0
      %v792 = vsel %vm540, %v729, 0
      %794 = vmatpush.msra.mxu0 0.0
      %795 = vmatpush.msra.mxu0 0.0
      %796 = vmatpush.msra.mxu0 0.0
      %797 = vmatpush.msra.mxu0 0.0
      %798 = vmatpush.msra.mxu0 0.0
      %799 = vmatpush.msra.mxu0 0.0
      %800 = vmatpush.msra.mxu0 0.0
      %801 = vmatpush.msra.mxu0 0.0
      %802 = vmatpush.msra.mxu0 0.0
      %803 = vmatpush.msra.mxu0 0.0
      %804 = vmatpush.msra.mxu0 0.0
      %805 = vmatpush.msra.mxu0 0.0
      %806 = vmatpush.msra.mxu0 0.0
      %807 = vmatpush.msra.mxu0 0.0
      %808 = vmatpush.msra.mxu0 0.0
      %809 = vmatpush.msra.mxu0 %v535
      %810 = vmatmul.f32.gmra.mxu0 %v792
      %v811 = vpop.f32.mrf.mxu0
      %v812 = vadd.f32 0.0, %v811
      %813 = vdwg.mxu0
      %v815 = vsel %vm540, %v744, 0
      %817 = vmatpush.msra.mxu0 0.0
      %818 = vmatpush.msra.mxu0 0.0
      %819 = vmatpush.msra.mxu0 0.0
      %820 = vmatpush.msra.mxu0 0.0
      %821 = vmatpush.msra.mxu0 0.0
      %822 = vmatpush.msra.mxu0 0.0
      %823 = vmatpush.msra.mxu0 0.0
      %824 = vmatpush.msra.mxu0 0.0
      %825 = vmatpush.msra.mxu0 0.0
      %826 = vmatpush.msra.mxu0 0.0
      %827 = vmatpush.msra.mxu0 0.0
      %828 = vmatpush.msra.mxu0 0.0
      %829 = vmatpush.msra.mxu0 0.0
      %830 = vmatpush.msra.mxu0 0.0
      %831 = vmatpush.msra.mxu0 0.0
      %832 = vmatpush.msra.mxu0 %v538
      %833 = vmatmul.f32.gmra.mxu0 %v815
      %v834 = vpop.f32.mrf.mxu0
      %v835 = vadd.f32 0.0, %v834
      %836 = vdwg.mxu0
      %837 = vst.msk [vmem:[%s378] sm:$0xff] %vm540, %v766
      %838 = vst.msk [vmem:[%s378 + $0x8] sm:$0xff] %vm540, %v789
      %839 = vst.msk [vmem:[%s378 + $0x10] sm:$0xff] %vm540, %v812
      %840 = vst.msk [vmem:[%s378 + $0x18] sm:$0xff] %vm540, %v835
      %s841 = scalar_lea.vmem %s3, 32
      %v842 = vld [vmem:[%s841] sm:$0xff]
      %v843 = vld [vmem:[%s841 + $0x8] sm:$0xff]
      %v844 = vld [vmem:[%s841 + $0x10] sm:$0xff]
      %v845 = vld [vmem:[%s841 + $0x18] sm:$0xff]
      %s846 = scalar_lea.vmem %s6, 1
      %v847 = vld [vmem:[%s846] sm:$0x1]
      %v849 = vperm.slane %v847, 0
      %851 = vmatpush.msra.mxu0 0.0
      %852 = vmatpush.msra.mxu0 0.0
      %853 = vmatpush.msra.mxu0 0.0
      %854 = vmatpush.msra.mxu0 0.0
      %855 = vmatpush.msra.mxu0 0.0
      %856 = vmatpush.msra.mxu0 0.0
      %857 = vmatpush.msra.mxu0 0.0
      %858 = vmatpush.msra.mxu0 0.0
      %859 = vmatpush.msra.mxu0 0.0
      %860 = vmatpush.msra.mxu0 0.0
      %861 = vmatpush.msra.mxu0 0.0
      %862 = vmatpush.msra.mxu0 0.0
      %863 = vmatpush.msra.mxu0 %v845
      %864 = vmatpush.msra.mxu0 %v844
      %865 = vmatpush.msra.mxu0 %v843
      %866 = vmatpush.msra.mxu0 %v842
      %867 = vmatmul.f32.gmra.mxu0 %v402
      %v868 = vpop.f32.mrf.mxu0
      %v869 = vadd.f32 %v849, %v868
      %870 = vmatmul.f32.gmra.mxu0 %v405
      %v871 = vpop.f32.mrf.mxu0
      %v872 = vadd.f32 %v849, %v871
      %873 = vmatmul.f32.gmra.mxu0 %v408
      %v874 = vpop.f32.mrf.mxu0
      %v875 = vadd.f32 %v849, %v874
      %876 = vmatmul.f32.gmra.mxu0 %v411
      %v877 = vpop.f32.mrf.mxu0
      %v878 = vadd.f32 %v849, %v877
      %879 = vdwg.mxu0
      %s880 = scalar_lea.vmem %s4, 32
      %v881 = vld [vmem:[%s880] sm:$0xff]
      %v882 = vld [vmem:[%s880 + $0x8] sm:$0xff]
      %v883 = vld [vmem:[%s880 + $0x10] sm:$0xff]
      %v884 = vld [vmem:[%s880 + $0x18] sm:$0xff]
      %s885 = scalar_lea.vmem %s7, 1
      %v886 = vld [vmem:[%s885] sm:$0x1]
      %v888 = vperm.slane %v886, 0
      %890 = vmatpush.msra.mxu0 0.0
      %891 = vmatpush.msra.mxu0 0.0
      %892 = vmatpush.msra.mxu0 0.0
      %893 = vmatpush.msra.mxu0 0.0
      %894 = vmatpush.msra.mxu0 0.0
      %895 = vmatpush.msra.mxu0 0.0
      %896 = vmatpush.msra.mxu0 0.0
      %897 = vmatpush.msra.mxu0 0.0
      %898 = vmatpush.msra.mxu0 0.0
      %899 = vmatpush.msra.mxu0 0.0
      %900 = vmatpush.msra.mxu0 0.0
      %901 = vmatpush.msra.mxu0 0.0
      %902 = vmatpush.msra.mxu0 %v884
      %903 = vmatpush.msra.mxu0 %v883
      %904 = vmatpush.msra.mxu0 %v882
      %905 = vmatpush.msra.mxu0 %v881
      %906 = vmatmul.f32.gmra.mxu0 %v451
      %v907 = vpop.f32.mrf.mxu0
      %v908 = vadd.f32 %v888, %v907
      %909 = vmatmul.f32.gmra.mxu0 %v454
      %v910 = vpop.f32.mrf.mxu0
      %v911 = vadd.f32 %v888, %v910
      %912 = vmatmul.f32.gmra.mxu0 %v457
      %v913 = vpop.f32.mrf.mxu0
      %v914 = vadd.f32 %v888, %v913
      %915 = vmatmul.f32.gmra.mxu0 %v460
      %v916 = vpop.f32.mrf.mxu0
      %v917 = vadd.f32 %v888, %v916
      %918 = vdwg.mxu0
      %s919 = scalar_lea.vmem %s5, 32
      %v920 = vld [vmem:[%s919] sm:$0xff]
      %v921 = vld [vmem:[%s919 + $0x8] sm:$0xff]
      %v922 = vld [vmem:[%s919 + $0x10] sm:$0xff]
      %v923 = vld [vmem:[%s919 + $0x18] sm:$0xff]
      %s924 = scalar_lea.vmem %s8, 1
      %v925 = vld [vmem:[%s924] sm:$0x1]
      %v927 = vperm.slane %v925, 0
      %929 = vmatpush.msra.mxu0 0.0
      %930 = vmatpush.msra.mxu0 0.0
      %931 = vmatpush.msra.mxu0 0.0
      %932 = vmatpush.msra.mxu0 0.0
      %933 = vmatpush.msra.mxu0 0.0
      %934 = vmatpush.msra.mxu0 0.0
      %935 = vmatpush.msra.mxu0 0.0
      %936 = vmatpush.msra.mxu0 0.0
      %937 = vmatpush.msra.mxu0 0.0
      %938 = vmatpush.msra.mxu0 0.0
      %939 = vmatpush.msra.mxu0 0.0
      %940 = vmatpush.msra.mxu0 0.0
      %941 = vmatpush.msra.mxu0 %v923
      %942 = vmatpush.msra.mxu0 %v922
      %943 = vmatpush.msra.mxu0 %v921
      %944 = vmatpush.msra.mxu0 %v920
      %945 = vmatmul.f32.gmra.mxu0 %v500
      %v946 = vpop.f32.mrf.mxu0
      %v947 = vadd.f32 %v927, %v946
      %948 = vmatmul.f32.gmra.mxu0 %v503
      %v949 = vpop.f32.mrf.mxu0
      %v950 = vadd.f32 %v927, %v949
      %951 = vmatmul.f32.gmra.mxu0 %v506
      %v952 = vpop.f32.mrf.mxu0
      %v953 = vadd.f32 %v927, %v952
      %954 = vmatmul.f32.gmra.mxu0 %v509
      %v955 = vpop.f32.mrf.mxu0
      %v956 = vadd.f32 %v927, %v955
      %957 = vdwg.mxu0
      %v959 = vsel %vm540, %v869, 0
      %v962 = vsel %vm540, %v908, 0
      %964 = vmatpush.xpose.msra.mxu0 0.0
      %965 = vmatpush.xpose.msra.mxu0 0.0
      %966 = vmatpush.xpose.msra.mxu0 0.0
      %967 = vmatpush.xpose.msra.mxu0 0.0
      %968 = vmatpush.xpose.msra.mxu0 0.0
      %969 = vmatpush.xpose.msra.mxu0 0.0
      %970 = vmatpush.xpose.msra.mxu0 0.0
      %971 = vmatpush.xpose.msra.mxu0 0.0
      %972 = vmatpush.xpose.msra.mxu0 0.0
      %973 = vmatpush.xpose.msra.mxu0 0.0
      %974 = vmatpush.xpose.msra.mxu0 0.0
      %975 = vmatpush.xpose.msra.mxu0 0.0
      %976 = vmatpush.xpose.msra.mxu0 0.0
      %977 = vmatpush.xpose.msra.mxu0 0.0
      %978 = vmatpush.xpose.msra.mxu0 0.0
      %979 = vmatpush.xpose.msra.mxu0 %v962
      %980 = vmatmul.f32.gmra.mxu0 %v959
      %v981 = vpop.f32.mrf.mxu0
      %v982 = vadd.f32 0.0, %v981
      %983 = vdwg.mxu0
      %v985 = vsel %vm540, %v872, 0
      %v988 = vsel %vm540, %v911, 0
      %990 = vmatpush.xpose.msra.mxu0 0.0
      %991 = vmatpush.xpose.msra.mxu0 0.0
      %992 = vmatpush.xpose.msra.mxu0 0.0
      %993 = vmatpush.xpose.msra.mxu0 0.0
      %994 = vmatpush.xpose.msra.mxu0 0.0
      %995 = vmatpush.xpose.msra.mxu0 0.0
      %996 = vmatpush.xpose.msra.mxu0 0.0
      %997 = vmatpush.xpose.msra.mxu0 0.0
      %998 = vmatpush.xpose.msra.mxu0 0.0
      %999 = vmatpush.xpose.msra.mxu0 0.0
      %1000 = vmatpush.xpose.msra.mxu0 0.0
      %1001 = vmatpush.xpose.msra.mxu0 0.0
      %1002 = vmatpush.xpose.msra.mxu0 0.0
      %1003 = vmatpush.xpose.msra.mxu0 0.0
      %1004 = vmatpush.xpose.msra.mxu0 0.0
      %1005 = vmatpush.xpose.msra.mxu0 %v988
      %1006 = vmatmul.f32.gmra.mxu0 %v985
      %v1007 = vpop.f32.mrf.mxu0
      %v1008 = vadd.f32 0.0, %v1007
      %1009 = vdwg.mxu0
      %v1011 = vsel %vm540, %v875, 0
      %v1014 = vsel %vm540, %v914, 0
      %1016 = vmatpush.xpose.msra.mxu0 0.0
      %1017 = vmatpush.xpose.msra.mxu0 0.0
      %1018 = vmatpush.xpose.msra.mxu0 0.0
      %1019 = vmatpush.xpose.msra.mxu0 0.0
      %1020 = vmatpush.xpose.msra.mxu0 0.0
      %1021 = vmatpush.xpose.msra.mxu0 0.0
      %1022 = vmatpush.xpose.msra.mxu0 0.0
      %1023 = vmatpush.xpose.msra.mxu0 0.0
      %1024 = vmatpush.xpose.msra.mxu0 0.0
      %1025 = vmatpush.xpose.msra.mxu0 0.0
      %1026 = vmatpush.xpose.msra.mxu0 0.0
      %1027 = vmatpush.xpose.msra.mxu0 0.0
      %1028 = vmatpush.xpose.msra.mxu0 0.0
      %1029 = vmatpush.xpose.msra.mxu0 0.0
      %1030 = vmatpush.xpose.msra.mxu0 0.0
      %1031 = vmatpush.xpose.msra.mxu0 %v1014
      %1032 = vmatmul.f32.gmra.mxu0 %v1011
      %v1033 = vpop.f32.mrf.mxu0
      %v1034 = vadd.f32 0.0, %v1033
      %1035 = vdwg.mxu0
      %v1037 = vsel %vm540, %v878, 0
      %v1040 = vsel %vm540, %v917, 0
      %1042 = vmatpush.xpose.msra.mxu0 0.0
      %1043 = vmatpush.xpose.msra.mxu0 0.0
      %1044 = vmatpush.xpose.msra.mxu0 0.0
      %1045 = vmatpush.xpose.msra.mxu0 0.0
      %1046 = vmatpush.xpose.msra.mxu0 0.0
      %1047 = vmatpush.xpose.msra.mxu0 0.0
      %1048 = vmatpush.xpose.msra.mxu0 0.0
      %1049 = vmatpush.xpose.msra.mxu0 0.0
      %1050 = vmatpush.xpose.msra.mxu0 0.0
      %1051 = vmatpush.xpose.msra.mxu0 0.0
      %1052 = vmatpush.xpose.msra.mxu0 0.0
      %1053 = vmatpush.xpose.msra.mxu0 0.0
      %1054 = vmatpush.xpose.msra.mxu0 0.0
      %1055 = vmatpush.xpose.msra.mxu0 0.0
      %1056 = vmatpush.xpose.msra.mxu0 0.0
      %1057 = vmatpush.xpose.msra.mxu0 %v1040
      %1058 = vmatmul.f32.gmra.mxu0 %v1037
      %v1059 = vpop.f32.mrf.mxu0
      %v1060 = vadd.f32 0.0, %v1059
      %1061 = vdwg.mxu0
      %v1062 = vmul.f32 %v982, 0.17677669
      %v1063 = vmul.f32 %v1008, 0.17677669
      %v1064 = vmul.f32 %v1034, 0.17677669
      %v1065 = vmul.f32 %v1060, 0.17677669
      %v1066 = vsel %vm540, %v1062, -inf
      %1067 = vmax.xlane.f32.xlu0 %v1066
      %v1068 = vpop.xlane.xlu0 %1067
      %v1069 = vsel %vm540, %v1063, -inf
      %1070 = vmax.xlane.f32.xlu0 %v1069
      %v1071 = vpop.xlane.xlu0 %1070
      %v1072 = vsel %vm540, %v1064, -inf
      %1073 = vmax.xlane.f32.xlu0 %v1072
      %v1074 = vpop.xlane.xlu0 %1073
      %v1075 = vsel %vm540, %v1065, -inf
      %1076 = vmax.xlane.f32.xlu0 %v1075
      %v1077 = vpop.xlane.xlu0 %1076
      %v1078 = vsub.f32 %v1062, %v1068
      %v1079 = vsub.f32 %v1063, %v1071
      %v1080 = vsub.f32 %v1064, %v1074
      %v1081 = vsub.f32 %v1065, %v1077
      %v1082 = vmul.f32 %v1078, 1.442695
      %v1083 = vpow.pop %v1082
      %v1084 = vmul.f32 %v1079, 1.442695
      %v1085 = vpow.pop %v1084
      %v1086 = vmul.f32 %v1080, 1.442695
      %v1087 = vpow.pop %v1086
      %v1088 = vmul.f32 %v1081, 1.442695
      %v1089 = vpow.pop %v1088
      %v1090 = vsel %vm540, %v1083, 0.0
      %1091 = vadd.xlane.f32.xlu0 %v1090
      %v1092 = vpop.xlane.xlu0 %1091
      %v1093 = vsel %vm540, %v1085, 0.0
      %1094 = vadd.xlane.f32.xlu0 %v1093
      %v1095 = vpop.xlane.xlu0 %1094
      %v1096 = vsel %vm540, %v1087, 0.0
      %1097 = vadd.xlane.f32.xlu0 %v1096
      %v1098 = vpop.xlane.xlu0 %1097
      %v1099 = vsel %vm540, %v1089, 0.0
      %1100 = vadd.xlane.f32.xlu0 %v1099
      %v1101 = vpop.xlane.xlu0 %1100
      %v1102 = vrcp.pop %v1092
      %v1103 = vmul.f32 %v1092, %v1102
      %v1104 = vsub.f32 1.0, %v1103
      %v1105 = vmul.f32 %v1102, %v1104
      %v1106 = vadd.f32 %v1102, %v1105
      %vm1107 = vweird.f32 %v1092
      %vm1108 = vweird.f32 %v1102
      %vm1109 = vmor %vm1107, %vm1108
      %v1110 = vsel %vm1109, %v1102, %v1106
      %v1111 = vand.u32 2147483647, %v1092
      %vm1112 = vcmp.eq.f32.partialorder %v1111, 8.507059e+37
      %v1113 = vand.u32 %v1092, 2147483648
      %v1114 = vor.u32 1.1754944e-38, %v1113
      %v1115 = vsel %vm1112, %v1114, %v1110
      %v1116 = vmul.f32 %v1083, %v1115
      %v1117 = vrcp.pop %v1095
      %v1118 = vmul.f32 %v1095, %v1117
      %v1119 = vsub.f32 1.0, %v1118
      %v1120 = vmul.f32 %v1117, %v1119
      %v1121 = vadd.f32 %v1117, %v1120
      %vm1122 = vweird.f32 %v1095
      %vm1123 = vweird.f32 %v1117
      %vm1124 = vmor %vm1122, %vm1123
      %v1125 = vsel %vm1124, %v1117, %v1121
      %v1126 = vand.u32 2147483647, %v1095
      %vm1127 = vcmp.eq.f32.partialorder %v1126, 8.507059e+37
      %v1128 = vand.u32 %v1095, 2147483648
      %v1129 = vor.u32 1.1754944e-38, %v1128
      %v1130 = vsel %vm1127, %v1129, %v1125
      %v1131 = vmul.f32 %v1085, %v1130
      %v1132 = vrcp.pop %v1098
      %v1133 = vmul.f32 %v1098, %v1132
      %v1134 = vsub.f32 1.0, %v1133
      %v1135 = vmul.f32 %v1132, %v1134
      %v1136 = vadd.f32 %v1132, %v1135
      %vm1137 = vweird.f32 %v1098
      %vm1138 = vweird.f32 %v1132
      %vm1139 = vmor %vm1137, %vm1138
      %v1140 = vsel %vm1139, %v1132, %v1136
      %v1141 = vand.u32 2147483647, %v1098
      %vm1142 = vcmp.eq.f32.partialorder %v1141, 8.507059e+37
      %v1143 = vand.u32 %v1098, 2147483648
      %v1144 = vor.u32 1.1754944e-38, %v1143
      %v1145 = vsel %vm1142, %v1144, %v1140
      %v1146 = vmul.f32 %v1087, %v1145
      %v1147 = vrcp.pop %v1101
      %v1148 = vmul.f32 %v1101, %v1147
      %v1149 = vsub.f32 1.0, %v1148
      %v1150 = vmul.f32 %v1147, %v1149
      %v1151 = vadd.f32 %v1147, %v1150
      %vm1152 = vweird.f32 %v1101
      %vm1153 = vweird.f32 %v1147
      %vm1154 = vmor %vm1152, %vm1153
      %v1155 = vsel %vm1154, %v1147, %v1151
      %v1156 = vand.u32 2147483647, %v1101
      %vm1157 = vcmp.eq.f32.partialorder %v1156, 8.507059e+37
      %v1158 = vand.u32 %v1101, 2147483648
      %v1159 = vor.u32 1.1754944e-38, %v1158
      %v1160 = vsel %vm1157, %v1159, %v1155
      %v1161 = vmul.f32 %v1089, %v1160
      %v1163 = vsel %vm540, %v1116, 0
      %1165 = vmatpush.msra.mxu0 0.0
      %1166 = vmatpush.msra.mxu0 0.0
      %1167 = vmatpush.msra.mxu0 0.0
      %1168 = vmatpush.msra.mxu0 0.0
      %1169 = vmatpush.msra.mxu0 0.0
      %1170 = vmatpush.msra.mxu0 0.0
      %1171 = vmatpush.msra.mxu0 0.0
      %1172 = vmatpush.msra.mxu0 0.0
      %1173 = vmatpush.msra.mxu0 0.0
      %1174 = vmatpush.msra.mxu0 0.0
      %1175 = vmatpush.msra.mxu0 0.0
      %1176 = vmatpush.msra.mxu0 0.0
      %1177 = vmatpush.msra.mxu0 0.0
      %1178 = vmatpush.msra.mxu0 0.0
      %1179 = vmatpush.msra.mxu0 0.0
      %1180 = vmatpush.msra.mxu0 %v947
      %1181 = vmatmul.f32.gmra.mxu0 %v1163
      %v1182 = vpop.f32.mrf.mxu0
      %v1183 = vadd.f32 0.0, %v1182
      %1184 = vdwg.mxu0
      %v1186 = vsel %vm540, %v1131, 0
      %1188 = vmatpush.msra.mxu0 0.0
      %1189 = vmatpush.msra.mxu0 0.0
      %1190 = vmatpush.msra.mxu0 0.0
      %1191 = vmatpush.msra.mxu0 0.0
      %1192 = vmatpush.msra.mxu0 0.0
      %1193 = vmatpush.msra.mxu0 0.0
      %1194 = vmatpush.msra.mxu0 0.0
      %1195 = vmatpush.msra.mxu0 0.0
      %1196 = vmatpush.msra.mxu0 0.0
      %1197 = vmatpush.msra.mxu0 0.0
      %1198 = vmatpush.msra.mxu0 0.0
      %1199 = vmatpush.msra.mxu0 0.0
      %1200 = vmatpush.msra.mxu0 0.0
      %1201 = vmatpush.msra.mxu0 0.0
      %1202 = vmatpush.msra.mxu0 0.0
      %1203 = vmatpush.msra.mxu0 %v950
      %1204 = vmatmul.f32.gmra.mxu0 %v1186
      %v1205 = vpop.f32.mrf.mxu0
      %v1206 = vadd.f32 0.0, %v1205
      %1207 = vdwg.mxu0
      %v1209 = vsel %vm540, %v1146, 0
      %1211 = vmatpush.msra.mxu0 0.0
      %1212 = vmatpush.msra.mxu0 0.0
      %1213 = vmatpush.msra.mxu0 0.0
      %1214 = vmatpush.msra.mxu0 0.0
      %1215 = vmatpush.msra.mxu0 0.0
      %1216 = vmatpush.msra.mxu0 0.0
      %1217 = vmatpush.msra.mxu0 0.0
      %1218 = vmatpush.msra.mxu0 0.0
      %1219 = vmatpush.msra.mxu0 0.0
      %1220 = vmatpush.msra.mxu0 0.0
      %1221 = vmatpush.msra.mxu0 0.0
      %1222 = vmatpush.msra.mxu0 0.0
      %1223 = vmatpush.msra.mxu0 0.0
      %1224 = vmatpush.msra.mxu0 0.0
      %1225 = vmatpush.msra.mxu0 0.0
      %1226 = vmatpush.msra.mxu0 %v953
      %1227 = vmatmul.f32.gmra.mxu0 %v1209
      %v1228 = vpop.f32.mrf.mxu0
      %v1229 = vadd.f32 0.0, %v1228
      %1230 = vdwg.mxu0
      %v1232 = vsel %vm540, %v1161, 0
      %1234 = vmatpush.msra.mxu0 0.0
      %1235 = vmatpush.msra.mxu0 0.0
      %1236 = vmatpush.msra.mxu0 0.0
      %1237 = vmatpush.msra.mxu0 0.0
      %1238 = vmatpush.msra.mxu0 0.0
      %1239 = vmatpush.msra.mxu0 0.0
      %1240 = vmatpush.msra.mxu0 0.0
      %1241 = vmatpush.msra.mxu0 0.0
      %1242 = vmatpush.msra.mxu0 0.0
      %1243 = vmatpush.msra.mxu0 0.0
      %1244 = vmatpush.msra.mxu0 0.0
      %1245 = vmatpush.msra.mxu0 0.0
      %1246 = vmatpush.msra.mxu0 0.0
      %1247 = vmatpush.msra.mxu0 0.0
      %1248 = vmatpush.msra.mxu0 0.0
      %1249 = vmatpush.msra.mxu0 %v956
      %1250 = vmatmul.f32.gmra.mxu0 %v1232
      %v1251 = vpop.f32.mrf.mxu0
      %v1252 = vadd.f32 0.0, %v1251
      %1253 = vdwg.mxu0
      %1258 = vrot.lane.b32.xlu0 %v1183, 8
      %v1259 = vpop.permute.xlu0 %1258
      %1260 = vrot.lane.b32.xlu0 %v1206, 8
      %v1261 = vpop.permute.xlu0 %1260
      %1262 = vrot.lane.b32.xlu0 %v1229, 8
      %v1263 = vpop.permute.xlu0 %1262
      %1264 = vrot.lane.b32.xlu0 %v1252, 8
      %v1265 = vpop.permute.xlu0 %1264
      %vm1270 = vcmask 130112
      %1271 = vst.msk [vmem:[%s378] sm:$0xff] %vm1270, %v1259
      %1272 = vst.msk [vmem:[%s378 + $0x8] sm:$0xff] %vm1270, %v1261
      %1273 = vst.msk [vmem:[%s378 + $0x10] sm:$0xff] %vm1270, %v1263
      %1274 = vst.msk [vmem:[%s378 + $0x18] sm:$0xff] %vm1270, %v1265
      %s1275 = scalar_lea.vmem %s3, 64
      %v1276 = vld [vmem:[%s1275] sm:$0xff]
      %v1277 = vld [vmem:[%s1275 + $0x8] sm:$0xff]
      %v1278 = vld [vmem:[%s1275 + $0x10] sm:$0xff]
      %v1279 = vld [vmem:[%s1275 + $0x18] sm:$0xff]
      %s1280 = scalar_lea.vmem %s6, 2
      %v1281 = vld [vmem:[%s1280] sm:$0x1]
      %v1283 = vperm.slane %v1281, 0
      %1285 = vmatpush.msra.mxu0 0.0
      %1286 = vmatpush.msra.mxu0 0.0
      %1287 = vmatpush.msra.mxu0 0.0
      %1288 = vmatpush.msra.mxu0 0.0
      %1289 = vmatpush.msra.mxu0 0.0
      %1290 = vmatpush.msra.mxu0 0.0
      %1291 = vmatpush.msra.mxu0 0.0
      %1292 = vmatpush.msra.mxu0 0.0
      %1293 = vmatpush.msra.mxu0 0.0
      %1294 = vmatpush.msra.mxu0 0.0
      %1295 = vmatpush.msra.mxu0 0.0
      %1296 = vmatpush.msra.mxu0 0.0
      %1297 = vmatpush.msra.mxu0 %v1279
      %1298 = vmatpush.msra.mxu0 %v1278
      %1299 = vmatpush.msra.mxu0 %v1277
      %1300 = vmatpush.msra.mxu0 %v1276
      %1301 = vmatmul.f32.gmra.mxu0 %v402
      %v1302 = vpop.f32.mrf.mxu0
      %v1303 = vadd.f32 %v1283, %v1302
      %1304 = vmatmul.f32.gmra.mxu0 %v405
      %v1305 = vpop.f32.mrf.mxu0
      %v1306 = vadd.f32 %v1283, %v1305
      %1307 = vmatmul.f32.gmra.mxu0 %v408
      %v1308 = vpop.f32.mrf.mxu0
      %v1309 = vadd.f32 %v1283, %v1308
      %1310 = vmatmul.f32.gmra.mxu0 %v411
      %v1311 = vpop.f32.mrf.mxu0
      %v1312 = vadd.f32 %v1283, %v1311
      %1313 = vdwg.mxu0
      %s1314 = scalar_lea.vmem %s4, 64
      %v1315 = vld [vmem:[%s1314] sm:$0xff]
      %v1316 = vld [vmem:[%s1314 + $0x8] sm:$0xff]
      %v1317 = vld [vmem:[%s1314 + $0x10] sm:$0xff]
      %v1318 = vld [vmem:[%s1314 + $0x18] sm:$0xff]
      %s1319 = scalar_lea.vmem %s7, 2
      %v1320 = vld [vmem:[%s1319] sm:$0x1]
      %v1322 = vperm.slane %v1320, 0
      %1324 = vmatpush.msra.mxu0 0.0
      %1325 = vmatpush.msra.mxu0 0.0
      %1326 = vmatpush.msra.mxu0 0.0
      %1327 = vmatpush.msra.mxu0 0.0
      %1328 = vmatpush.msra.mxu0 0.0
      %1329 = vmatpush.msra.mxu0 0.0
      %1330 = vmatpush.msra.mxu0 0.0
      %1331 = vmatpush.msra.mxu0 0.0
      %1332 = vmatpush.msra.mxu0 0.0
      %1333 = vmatpush.msra.mxu0 0.0
      %1334 = vmatpush.msra.mxu0 0.0
      %1335 = vmatpush.msra.mxu0 0.0
      %1336 = vmatpush.msra.mxu0 %v1318
      %1337 = vmatpush.msra.mxu0 %v1317
      %1338 = vmatpush.msra.mxu0 %v1316
      %1339 = vmatpush.msra.mxu0 %v1315
      %1340 = vmatmul.f32.gmra.mxu0 %v451
      %v1341 = vpop.f32.mrf.mxu0
      %v1342 = vadd.f32 %v1322, %v1341
      %1343 = vmatmul.f32.gmra.mxu0 %v454
      %v1344 = vpop.f32.mrf.mxu0
      %v1345 = vadd.f32 %v1322, %v1344
      %1346 = vmatmul.f32.gmra.mxu0 %v457
      %v1347 = vpop.f32.mrf.mxu0
      %v1348 = vadd.f32 %v1322, %v1347
      %1349 = vmatmul.f32.gmra.mxu0 %v460
      %v1350 = vpop.f32.mrf.mxu0
      %v1351 = vadd.f32 %v1322, %v1350
      %1352 = vdwg.mxu0
      %s1353 = scalar_lea.vmem %s5, 64
      %v1354 = vld [vmem:[%s1353] sm:$0xff]
      %v1355 = vld [vmem:[%s1353 + $0x8] sm:$0xff]
      %v1356 = vld [vmem:[%s1353 + $0x10] sm:$0xff]
      %v1357 = vld [vmem:[%s1353 + $0x18] sm:$0xff]
      %s1358 = scalar_lea.vmem %s8, 2
      %v1359 = vld [vmem:[%s1358] sm:$0x1]
      %v1361 = vperm.slane %v1359, 0
      %1363 = vmatpush.msra.mxu0 0.0
      %1364 = vmatpush.msra.mxu0 0.0
      %1365 = vmatpush.msra.mxu0 0.0
      %1366 = vmatpush.msra.mxu0 0.0
      %1367 = vmatpush.msra.mxu0 0.0
      %1368 = vmatpush.msra.mxu0 0.0
      %1369 = vmatpush.msra.mxu0 0.0
      %1370 = vmatpush.msra.mxu0 0.0
      %1371 = vmatpush.msra.mxu0 0.0
      %1372 = vmatpush.msra.mxu0 0.0
      %1373 = vmatpush.msra.mxu0 0.0
      %1374 = vmatpush.msra.mxu0 0.0
      %1375 = vmatpush.msra.mxu0 %v1357
      %1376 = vmatpush.msra.mxu0 %v1356
      %1377 = vmatpush.msra.mxu0 %v1355
      %1378 = vmatpush.msra.mxu0 %v1354
      %1379 = vmatmul.f32.gmra.mxu0 %v500
      %v1380 = vpop.f32.mrf.mxu0
      %v1381 = vadd.f32 %v1361, %v1380
      %1382 = vmatmul.f32.gmra.mxu0 %v503
      %v1383 = vpop.f32.mrf.mxu0
      %v1384 = vadd.f32 %v1361, %v1383
      %1385 = vmatmul.f32.gmra.mxu0 %v506
      %v1386 = vpop.f32.mrf.mxu0
      %v1387 = vadd.f32 %v1361, %v1386
      %1388 = vmatmul.f32.gmra.mxu0 %v509
      %v1389 = vpop.f32.mrf.mxu0
      %v1390 = vadd.f32 %v1361, %v1389
      %1391 = vdwg.mxu0
      %v1393 = vsel %vm540, %v1303, 0
      %v1396 = vsel %vm540, %v1342, 0
      %1398 = vmatpush.xpose.msra.mxu0 0.0
      %1399 = vmatpush.xpose.msra.mxu0 0.0
      %1400 = vmatpush.xpose.msra.mxu0 0.0
      %1401 = vmatpush.xpose.msra.mxu0 0.0
      %1402 = vmatpush.xpose.msra.mxu0 0.0
      %1403 = vmatpush.xpose.msra.mxu0 0.0
      %1404 = vmatpush.xpose.msra.mxu0 0.0
      %1405 = vmatpush.xpose.msra.mxu0 0.0
      %1406 = vmatpush.xpose.msra.mxu0 0.0
      %1407 = vmatpush.xpose.msra.mxu0 0.0
      %1408 = vmatpush.xpose.msra.mxu0 0.0
      %1409 = vmatpush.xpose.msra.mxu0 0.0
      %1410 = vmatpush.xpose.msra.mxu0 0.0
      %1411 = vmatpush.xpose.msra.mxu0 0.0
      %1412 = vmatpush.xpose.msra.mxu0 0.0
      %1413 = vmatpush.xpose.msra.mxu0 %v1396
      %1414 = vmatmul.f32.gmra.mxu0 %v1393
      %v1415 = vpop.f32.mrf.mxu0
      %v1416 = vadd.f32 0.0, %v1415
      %1417 = vdwg.mxu0
      %v1419 = vsel %vm540, %v1306, 0
      %v1422 = vsel %vm540, %v1345, 0
      %1424 = vmatpush.xpose.msra.mxu0 0.0
      %1425 = vmatpush.xpose.msra.mxu0 0.0
      %1426 = vmatpush.xpose.msra.mxu0 0.0
      %1427 = vmatpush.xpose.msra.mxu0 0.0
      %1428 = vmatpush.xpose.msra.mxu0 0.0
      %1429 = vmatpush.xpose.msra.mxu0 0.0
      %1430 = vmatpush.xpose.msra.mxu0 0.0
      %1431 = vmatpush.xpose.msra.mxu0 0.0
      %1432 = vmatpush.xpose.msra.mxu0 0.0
      %1433 = vmatpush.xpose.msra.mxu0 0.0
      %1434 = vmatpush.xpose.msra.mxu0 0.0
      %1435 = vmatpush.xpose.msra.mxu0 0.0
      %1436 = vmatpush.xpose.msra.mxu0 0.0
      %1437 = vmatpush.xpose.msra.mxu0 0.0
      %1438 = vmatpush.xpose.msra.mxu0 0.0
      %1439 = vmatpush.xpose.msra.mxu0 %v1422
      %1440 = vmatmul.f32.gmra.mxu0 %v1419
      %v1441 = vpop.f32.mrf.mxu0
      %v1442 = vadd.f32 0.0, %v1441
      %1443 = vdwg.mxu0
      %v1445 = vsel %vm540, %v1309, 0
      %v1448 = vsel %vm540, %v1348, 0
      %1450 = vmatpush.xpose.msra.mxu0 0.0
      %1451 = vmatpush.xpose.msra.mxu0 0.0
      %1452 = vmatpush.xpose.msra.mxu0 0.0
      %1453 = vmatpush.xpose.msra.mxu0 0.0
      %1454 = vmatpush.xpose.msra.mxu0 0.0
      %1455 = vmatpush.xpose.msra.mxu0 0.0
      %1456 = vmatpush.xpose.msra.mxu0 0.0
      %1457 = vmatpush.xpose.msra.mxu0 0.0
      %1458 = vmatpush.xpose.msra.mxu0 0.0
      %1459 = vmatpush.xpose.msra.mxu0 0.0
      %1460 = vmatpush.xpose.msra.mxu0 0.0
      %1461 = vmatpush.xpose.msra.mxu0 0.0
      %1462 = vmatpush.xpose.msra.mxu0 0.0
      %1463 = vmatpush.xpose.msra.mxu0 0.0
      %1464 = vmatpush.xpose.msra.mxu0 0.0
      %1465 = vmatpush.xpose.msra.mxu0 %v1448
      %1466 = vmatmul.f32.gmra.mxu0 %v1445
      %v1467 = vpop.f32.mrf.mxu0
      %v1468 = vadd.f32 0.0, %v1467
      %1469 = vdwg.mxu0
      %v1471 = vsel %vm540, %v1312, 0
      %v1474 = vsel %vm540, %v1351, 0
      %1476 = vmatpush.xpose.msra.mxu0 0.0
      %1477 = vmatpush.xpose.msra.mxu0 0.0
      %1478 = vmatpush.xpose.msra.mxu0 0.0
      %1479 = vmatpush.xpose.msra.mxu0 0.0
      %1480 = vmatpush.xpose.msra.mxu0 0.0
      %1481 = vmatpush.xpose.msra.mxu0 0.0
      %1482 = vmatpush.xpose.msra.mxu0 0.0
      %1483 = vmatpush.xpose.msra.mxu0 0.0
      %1484 = vmatpush.xpose.msra.mxu0 0.0
      %1485 = vmatpush.xpose.msra.mxu0 0.0
      %1486 = vmatpush.xpose.msra.mxu0 0.0
      %1487 = vmatpush.xpose.msra.mxu0 0.0
      %1488 = vmatpush.xpose.msra.mxu0 0.0
      %1489 = vmatpush.xpose.msra.mxu0 0.0
      %1490 = vmatpush.xpose.msra.mxu0 0.0
      %1491 = vmatpush.xpose.msra.mxu0 %v1474
      %1492 = vmatmul.f32.gmra.mxu0 %v1471
      %v1493 = vpop.f32.mrf.mxu0
      %v1494 = vadd.f32 0.0, %v1493
      %1495 = vdwg.mxu0
      %v1496 = vmul.f32 %v1416, 0.17677669
      %v1497 = vmul.f32 %v1442, 0.17677669
      %v1498 = vmul.f32 %v1468, 0.17677669
      %v1499 = vmul.f32 %v1494, 0.17677669
      %v1500 = vsel %vm540, %v1496, -inf
      %1501 = vmax.xlane.f32.xlu0 %v1500
      %v1502 = vpop.xlane.xlu0 %1501
      %v1503 = vsel %vm540, %v1497, -inf
      %1504 = vmax.xlane.f32.xlu0 %v1503
      %v1505 = vpop.xlane.xlu0 %1504
      %v1506 = vsel %vm540, %v1498, -inf
      %1507 = vmax.xlane.f32.xlu0 %v1506
      %v1508 = vpop.xlane.xlu0 %1507
      %v1509 = vsel %vm540, %v1499, -inf
      %1510 = vmax.xlane.f32.xlu0 %v1509
      %v1511 = vpop.xlane.xlu0 %1510
      %v1512 = vsub.f32 %v1496, %v1502
      %v1513 = vsub.f32 %v1497, %v1505
      %v1514 = vsub.f32 %v1498, %v1508
      %v1515 = vsub.f32 %v1499, %v1511
      %v1516 = vmul.f32 %v1512, 1.442695
      %v1517 = vpow.pop %v1516
      %v1518 = vmul.f32 %v1513, 1.442695
      %v1519 = vpow.pop %v1518
      %v1520 = vmul.f32 %v1514, 1.442695
      %v1521 = vpow.pop %v1520
      %v1522 = vmul.f32 %v1515, 1.442695
      %v1523 = vpow.pop %v1522
      %v1524 = vsel %vm540, %v1517, 0.0
      %1525 = vadd.xlane.f32.xlu0 %v1524
      %v1526 = vpop.xlane.xlu0 %1525
      %v1527 = vsel %vm540, %v1519, 0.0
      %1528 = vadd.xlane.f32.xlu0 %v1527
      %v1529 = vpop.xlane.xlu0 %1528
      %v1530 = vsel %vm540, %v1521, 0.0
      %1531 = vadd.xlane.f32.xlu0 %v1530
      %v1532 = vpop.xlane.xlu0 %1531
      %v1533 = vsel %vm540, %v1523, 0.0
      %1534 = vadd.xlane.f32.xlu0 %v1533
      %v1535 = vpop.xlane.xlu0 %1534
      %v1536 = vrcp.pop %v1526
      %v1537 = vmul.f32 %v1526, %v1536
      %v1538 = vsub.f32 1.0, %v1537
      %v1539 = vmul.f32 %v1536, %v1538
      %v1540 = vadd.f32 %v1536, %v1539
      %vm1541 = vweird.f32 %v1526
      %vm1542 = vweird.f32 %v1536
      %vm1543 = vmor %vm1541, %vm1542
      %v1544 = vsel %vm1543, %v1536, %v1540
      %v1545 = vand.u32 2147483647, %v1526
      %vm1546 = vcmp.eq.f32.partialorder %v1545, 8.507059e+37
      %v1547 = vand.u32 %v1526, 2147483648
      %v1548 = vor.u32 1.1754944e-38, %v1547
      %v1549 = vsel %vm1546, %v1548, %v1544
      %v1550 = vmul.f32 %v1517, %v1549
      %v1551 = vrcp.pop %v1529
      %v1552 = vmul.f32 %v1529, %v1551
      %v1553 = vsub.f32 1.0, %v1552
      %v1554 = vmul.f32 %v1551, %v1553
      %v1555 = vadd.f32 %v1551, %v1554
      %vm1556 = vweird.f32 %v1529
      %vm1557 = vweird.f32 %v1551
      %vm1558 = vmor %vm1556, %vm1557
      %v1559 = vsel %vm1558, %v1551, %v1555
      %v1560 = vand.u32 2147483647, %v1529
      %vm1561 = vcmp.eq.f32.partialorder %v1560, 8.507059e+37
      %v1562 = vand.u32 %v1529, 2147483648
      %v1563 = vor.u32 1.1754944e-38, %v1562
      %v1564 = vsel %vm1561, %v1563, %v1559
      %v1565 = vmul.f32 %v1519, %v1564
      %v1566 = vrcp.pop %v1532
      %v1567 = vmul.f32 %v1532, %v1566
      %v1568 = vsub.f32 1.0, %v1567
      %v1569 = vmul.f32 %v1566, %v1568
      %v1570 = vadd.f32 %v1566, %v1569
      %vm1571 = vweird.f32 %v1532
      %vm1572 = vweird.f32 %v1566
      %vm1573 = vmor %vm1571, %vm1572
      %v1574 = vsel %vm1573, %v1566, %v1570
      %v1575 = vand.u32 2147483647, %v1532
      %vm1576 = vcmp.eq.f32.partialorder %v1575, 8.507059e+37
      %v1577 = vand.u32 %v1532, 2147483648
      %v1578 = vor.u32 1.1754944e-38, %v1577
      %v1579 = vsel %vm1576, %v1578, %v1574
      %v1580 = vmul.f32 %v1521, %v1579
      %v1581 = vrcp.pop %v1535
      %v1582 = vmul.f32 %v1535, %v1581
      %v1583 = vsub.f32 1.0, %v1582
      %v1584 = vmul.f32 %v1581, %v1583
      %v1585 = vadd.f32 %v1581, %v1584
      %vm1586 = vweird.f32 %v1535
      %vm1587 = vweird.f32 %v1581
      %vm1588 = vmor %vm1586, %vm1587
      %v1589 = vsel %vm1588, %v1581, %v1585
      %v1590 = vand.u32 2147483647, %v1535
      %vm1591 = vcmp.eq.f32.partialorder %v1590, 8.507059e+37
      %v1592 = vand.u32 %v1535, 2147483648
      %v1593 = vor.u32 1.1754944e-38, %v1592
      %v1594 = vsel %vm1591, %v1593, %v1589
      %v1595 = vmul.f32 %v1523, %v1594
      %v1597 = vsel %vm540, %v1550, 0
      %1599 = vmatpush.msra.mxu0 0.0
      %1600 = vmatpush.msra.mxu0 0.0
      %1601 = vmatpush.msra.mxu0 0.0
      %1602 = vmatpush.msra.mxu0 0.0
      %1603 = vmatpush.msra.mxu0 0.0
      %1604 = vmatpush.msra.mxu0 0.0
      %1605 = vmatpush.msra.mxu0 0.0
      %1606 = vmatpush.msra.mxu0 0.0
      %1607 = vmatpush.msra.mxu0 0.0
      %1608 = vmatpush.msra.mxu0 0.0
      %1609 = vmatpush.msra.mxu0 0.0
      %1610 = vmatpush.msra.mxu0 0.0
      %1611 = vmatpush.msra.mxu0 0.0
      %1612 = vmatpush.msra.mxu0 0.0
      %1613 = vmatpush.msra.mxu0 0.0
      %1614 = vmatpush.msra.mxu0 %v1381
      %1615 = vmatmul.f32.gmra.mxu0 %v1597
      %v1616 = vpop.f32.mrf.mxu0
      %v1617 = vadd.f32 0.0, %v1616
      %1618 = vdwg.mxu0
      %v1620 = vsel %vm540, %v1565, 0
      %1622 = vmatpush.msra.mxu0 0.0
      %1623 = vmatpush.msra.mxu0 0.0
      %1624 = vmatpush.msra.mxu0 0.0
      %1625 = vmatpush.msra.mxu0 0.0
      %1626 = vmatpush.msra.mxu0 0.0
      %1627 = vmatpush.msra.mxu0 0.0
      %1628 = vmatpush.msra.mxu0 0.0
      %1629 = vmatpush.msra.mxu0 0.0
      %1630 = vmatpush.msra.mxu0 0.0
      %1631 = vmatpush.msra.mxu0 0.0
      %1632 = vmatpush.msra.mxu0 0.0
      %1633 = vmatpush.msra.mxu0 0.0
      %1634 = vmatpush.msra.mxu0 0.0
      %1635 = vmatpush.msra.mxu0 0.0
      %1636 = vmatpush.msra.mxu0 0.0
      %1637 = vmatpush.msra.mxu0 %v1384
      %1638 = vmatmul.f32.gmra.mxu0 %v1620
      %v1639 = vpop.f32.mrf.mxu0
      %v1640 = vadd.f32 0.0, %v1639
      %1641 = vdwg.mxu0
      %v1643 = vsel %vm540, %v1580, 0
      %1645 = vmatpush.msra.mxu0 0.0
      %1646 = vmatpush.msra.mxu0 0.0
      %1647 = vmatpush.msra.mxu0 0.0
      %1648 = vmatpush.msra.mxu0 0.0
      %1649 = vmatpush.msra.mxu0 0.0
      %1650 = vmatpush.msra.mxu0 0.0
      %1651 = vmatpush.msra.mxu0 0.0
      %1652 = vmatpush.msra.mxu0 0.0
      %1653 = vmatpush.msra.mxu0 0.0
      %1654 = vmatpush.msra.mxu0 0.0
      %1655 = vmatpush.msra.mxu0 0.0
      %1656 = vmatpush.msra.mxu0 0.0
      %1657 = vmatpush.msra.mxu0 0.0
      %1658 = vmatpush.msra.mxu0 0.0
      %1659 = vmatpush.msra.mxu0 0.0
      %1660 = vmatpush.msra.mxu0 %v1387
      %1661 = vmatmul.f32.gmra.mxu0 %v1643
      %v1662 = vpop.f32.mrf.mxu0
      %v1663 = vadd.f32 0.0, %v1662
      %1664 = vdwg.mxu0
      %v1666 = vsel %vm540, %v1595, 0
      %1668 = vmatpush.msra.mxu0 0.0
      %1669 = vmatpush.msra.mxu0 0.0
      %1670 = vmatpush.msra.mxu0 0.0
      %1671 = vmatpush.msra.mxu0 0.0
      %1672 = vmatpush.msra.mxu0 0.0
      %1673 = vmatpush.msra.mxu0 0.0
      %1674 = vmatpush.msra.mxu0 0.0
      %1675 = vmatpush.msra.mxu0 0.0
      %1676 = vmatpush.msra.mxu0 0.0
      %1677 = vmatpush.msra.mxu0 0.0
      %1678 = vmatpush.msra.mxu0 0.0
      %1679 = vmatpush.msra.mxu0 0.0
      %1680 = vmatpush.msra.mxu0 0.0
      %1681 = vmatpush.msra.mxu0 0.0
      %1682 = vmatpush.msra.mxu0 0.0
      %1683 = vmatpush.msra.mxu0 %v1390
      %1684 = vmatmul.f32.gmra.mxu0 %v1666
      %v1685 = vpop.f32.mrf.mxu0
      %v1686 = vadd.f32 0.0, %v1685
      %1687 = vdwg.mxu0
      %1692 = vrot.lane.b32.xlu0 %v1617, 16
      %v1693 = vpop.permute.xlu0 %1692
      %1694 = vrot.lane.b32.xlu0 %v1640, 16
      %v1695 = vpop.permute.xlu0 %1694
      %1696 = vrot.lane.b32.xlu0 %v1663, 16
      %v1697 = vpop.permute.xlu0 %1696
      %1698 = vrot.lane.b32.xlu0 %v1686, 16
      %v1699 = vpop.permute.xlu0 %1698
      %vm1704 = vcmask 195712
      %1705 = vst.msk [vmem:[%s378] sm:$0xff] %vm1704, %v1693
      %1706 = vst.msk [vmem:[%s378 + $0x8] sm:$0xff] %vm1704, %v1695
      %1707 = vst.msk [vmem:[%s378 + $0x10] sm:$0xff] %vm1704, %v1697
      %1708 = vst.msk [vmem:[%s378 + $0x18] sm:$0xff] %vm1704, %v1699
      %s1709 = scalar_lea.vmem %s3, 96
      %v1710 = vld [vmem:[%s1709] sm:$0xff]
      %v1711 = vld [vmem:[%s1709 + $0x8] sm:$0xff]
      %v1712 = vld [vmem:[%s1709 + $0x10] sm:$0xff]
      %v1713 = vld [vmem:[%s1709 + $0x18] sm:$0xff]
      %s1714 = scalar_lea.vmem %s6, 3
      %v1715 = vld [vmem:[%s1714] sm:$0x1]
      %v1717 = vperm.slane %v1715, 0
      %1719 = vmatpush.msra.mxu0 0.0
      %1720 = vmatpush.msra.mxu0 0.0
      %1721 = vmatpush.msra.mxu0 0.0
      %1722 = vmatpush.msra.mxu0 0.0
      %1723 = vmatpush.msra.mxu0 0.0
      %1724 = vmatpush.msra.mxu0 0.0
      %1725 = vmatpush.msra.mxu0 0.0
      %1726 = vmatpush.msra.mxu0 0.0
      %1727 = vmatpush.msra.mxu0 0.0
      %1728 = vmatpush.msra.mxu0 0.0
      %1729 = vmatpush.msra.mxu0 0.0
      %1730 = vmatpush.msra.mxu0 0.0
      %1731 = vmatpush.msra.mxu0 %v1713
      %1732 = vmatpush.msra.mxu0 %v1712
      %1733 = vmatpush.msra.mxu0 %v1711
      %1734 = vmatpush.msra.mxu0 %v1710
      %1735 = vmatmul.f32.gmra.mxu0 %v402
      %v1736 = vpop.f32.mrf.mxu0
      %v1737 = vadd.f32 %v1717, %v1736
      %1738 = vmatmul.f32.gmra.mxu0 %v405
      %v1739 = vpop.f32.mrf.mxu0
      %v1740 = vadd.f32 %v1717, %v1739
      %1741 = vmatmul.f32.gmra.mxu0 %v408
      %v1742 = vpop.f32.mrf.mxu0
      %v1743 = vadd.f32 %v1717, %v1742
      %1744 = vmatmul.f32.gmra.mxu0 %v411
      %v1745 = vpop.f32.mrf.mxu0
      %v1746 = vadd.f32 %v1717, %v1745
      %1747 = vdwg.mxu0
      %s1748 = scalar_lea.vmem %s4, 96
      %v1749 = vld [vmem:[%s1748] sm:$0xff]
      %v1750 = vld [vmem:[%s1748 + $0x8] sm:$0xff]
      %v1751 = vld [vmem:[%s1748 + $0x10] sm:$0xff]
      %v1752 = vld [vmem:[%s1748 + $0x18] sm:$0xff]
      %s1753 = scalar_lea.vmem %s7, 3
      %v1754 = vld [vmem:[%s1753] sm:$0x1]
      %v1756 = vperm.slane %v1754, 0
      %1758 = vmatpush.msra.mxu0 0.0
      %1759 = vmatpush.msra.mxu0 0.0
      %1760 = vmatpush.msra.mxu0 0.0
      %1761 = vmatpush.msra.mxu0 0.0
      %1762 = vmatpush.msra.mxu0 0.0
      %1763 = vmatpush.msra.mxu0 0.0
      %1764 = vmatpush.msra.mxu0 0.0
      %1765 = vmatpush.msra.mxu0 0.0
      %1766 = vmatpush.msra.mxu0 0.0
      %1767 = vmatpush.msra.mxu0 0.0
      %1768 = vmatpush.msra.mxu0 0.0
      %1769 = vmatpush.msra.mxu0 0.0
      %1770 = vmatpush.msra.mxu0 %v1752
      %1771 = vmatpush.msra.mxu0 %v1751
      %1772 = vmatpush.msra.mxu0 %v1750
      %1773 = vmatpush.msra.mxu0 %v1749
      %1774 = vmatmul.f32.gmra.mxu0 %v451
      %v1775 = vpop.f32.mrf.mxu0
      %v1776 = vadd.f32 %v1756, %v1775
      %1777 = vmatmul.f32.gmra.mxu0 %v454
      %v1778 = vpop.f32.mrf.mxu0
      %v1779 = vadd.f32 %v1756, %v1778
      %1780 = vmatmul.f32.gmra.mxu0 %v457
      %v1781 = vpop.f32.mrf.mxu0
      %v1782 = vadd.f32 %v1756, %v1781
      %1783 = vmatmul.f32.gmra.mxu0 %v460
      %v1784 = vpop.f32.mrf.mxu0
      %v1785 = vadd.f32 %v1756, %v1784
      %1786 = vdwg.mxu0
      %s1787 = scalar_lea.vmem %s5, 96
      %v1788 = vld [vmem:[%s1787] sm:$0xff]
      %v1789 = vld [vmem:[%s1787 + $0x8] sm:$0xff]
      %v1790 = vld [vmem:[%s1787 + $0x10] sm:$0xff]
      %v1791 = vld [vmem:[%s1787 + $0x18] sm:$0xff]
      %s1792 = scalar_lea.vmem %s8, 3
      %v1793 = vld [vmem:[%s1792] sm:$0x1]
      %v1795 = vperm.slane %v1793, 0
      %1797 = vmatpush.msra.mxu0 0.0
      %1798 = vmatpush.msra.mxu0 0.0
      %1799 = vmatpush.msra.mxu0 0.0
      %1800 = vmatpush.msra.mxu0 0.0
      %1801 = vmatpush.msra.mxu0 0.0
      %1802 = vmatpush.msra.mxu0 0.0
      %1803 = vmatpush.msra.mxu0 0.0
      %1804 = vmatpush.msra.mxu0 0.0
      %1805 = vmatpush.msra.mxu0 0.0
      %1806 = vmatpush.msra.mxu0 0.0
      %1807 = vmatpush.msra.mxu0 0.0
      %1808 = vmatpush.msra.mxu0 0.0
      %1809 = vmatpush.msra.mxu0 %v1791
      %1810 = vmatpush.msra.mxu0 %v1790
      %1811 = vmatpush.msra.mxu0 %v1789
      %1812 = vmatpush.msra.mxu0 %v1788
      %1813 = vmatmul.f32.gmra.mxu0 %v500
      %v1814 = vpop.f32.mrf.mxu0
      %v1815 = vadd.f32 %v1795, %v1814
      %1816 = vmatmul.f32.gmra.mxu0 %v503
      %v1817 = vpop.f32.mrf.mxu0
      %v1818 = vadd.f32 %v1795, %v1817
      %1819 = vmatmul.f32.gmra.mxu0 %v506
      %v1820 = vpop.f32.mrf.mxu0
      %v1821 = vadd.f32 %v1795, %v1820
      %1822 = vmatmul.f32.gmra.mxu0 %v509
      %v1823 = vpop.f32.mrf.mxu0
      %v1824 = vadd.f32 %v1795, %v1823
      %1825 = vdwg.mxu0
      %v1827 = vsel %vm540, %v1737, 0
      %v1830 = vsel %vm540, %v1776, 0
      %1832 = vmatpush.xpose.msra.mxu0 0.0
      %1833 = vmatpush.xpose.msra.mxu0 0.0
      %1834 = vmatpush.xpose.msra.mxu0 0.0
      %1835 = vmatpush.xpose.msra.mxu0 0.0
      %1836 = vmatpush.xpose.msra.mxu0 0.0
      %1837 = vmatpush.xpose.msra.mxu0 0.0
      %1838 = vmatpush.xpose.msra.mxu0 0.0
      %1839 = vmatpush.xpose.msra.mxu0 0.0
      %1840 = vmatpush.xpose.msra.mxu0 0.0
      %1841 = vmatpush.xpose.msra.mxu0 0.0
      %1842 = vmatpush.xpose.msra.mxu0 0.0
      %1843 = vmatpush.xpose.msra.mxu0 0.0
      %1844 = vmatpush.xpose.msra.mxu0 0.0
      %1845 = vmatpush.xpose.msra.mxu0 0.0
      %1846 = vmatpush.xpose.msra.mxu0 0.0
      %1847 = vmatpush.xpose.msra.mxu0 %v1830
      %1848 = vmatmul.f32.gmra.mxu0 %v1827
      %v1849 = vpop.f32.mrf.mxu0
      %v1850 = vadd.f32 0.0, %v1849
      %1851 = vdwg.mxu0
      %v1853 = vsel %vm540, %v1740, 0
      %v1856 = vsel %vm540, %v1779, 0
      %1858 = vmatpush.xpose.msra.mxu0 0.0
      %1859 = vmatpush.xpose.msra.mxu0 0.0
      %1860 = vmatpush.xpose.msra.mxu0 0.0
      %1861 = vmatpush.xpose.msra.mxu0 0.0
      %1862 = vmatpush.xpose.msra.mxu0 0.0
      %1863 = vmatpush.xpose.msra.mxu0 0.0
      %1864 = vmatpush.xpose.msra.mxu0 0.0
      %1865 = vmatpush.xpose.msra.mxu0 0.0
      %1866 = vmatpush.xpose.msra.mxu0 0.0
      %1867 = vmatpush.xpose.msra.mxu0 0.0
      %1868 = vmatpush.xpose.msra.mxu0 0.0
      %1869 = vmatpush.xpose.msra.mxu0 0.0
      %1870 = vmatpush.xpose.msra.mxu0 0.0
      %1871 = vmatpush.xpose.msra.mxu0 0.0
      %1872 = vmatpush.xpose.msra.mxu0 0.0
      %1873 = vmatpush.xpose.msra.mxu0 %v1856
      %1874 = vmatmul.f32.gmra.mxu0 %v1853
      %v1875 = vpop.f32.mrf.mxu0
      %v1876 = vadd.f32 0.0, %v1875
      %1877 = vdwg.mxu0
      %v1879 = vsel %vm540, %v1743, 0
      %v1882 = vsel %vm540, %v1782, 0
      %1884 = vmatpush.xpose.msra.mxu0 0.0
      %1885 = vmatpush.xpose.msra.mxu0 0.0
      %1886 = vmatpush.xpose.msra.mxu0 0.0
      %1887 = vmatpush.xpose.msra.mxu0 0.0
      %1888 = vmatpush.xpose.msra.mxu0 0.0
      %1889 = vmatpush.xpose.msra.mxu0 0.0
      %1890 = vmatpush.xpose.msra.mxu0 0.0
      %1891 = vmatpush.xpose.msra.mxu0 0.0
      %1892 = vmatpush.xpose.msra.mxu0 0.0
      %1893 = vmatpush.xpose.msra.mxu0 0.0
      %1894 = vmatpush.xpose.msra.mxu0 0.0
      %1895 = vmatpush.xpose.msra.mxu0 0.0
      %1896 = vmatpush.xpose.msra.mxu0 0.0
      %1897 = vmatpush.xpose.msra.mxu0 0.0
      %1898 = vmatpush.xpose.msra.mxu0 0.0
      %1899 = vmatpush.xpose.msra.mxu0 %v1882
      %1900 = vmatmul.f32.gmra.mxu0 %v1879
      %v1901 = vpop.f32.mrf.mxu0
      %v1902 = vadd.f32 0.0, %v1901
      %1903 = vdwg.mxu0
      %v1905 = vsel %vm540, %v1746, 0
      %v1908 = vsel %vm540, %v1785, 0
      %1910 = vmatpush.xpose.msra.mxu0 0.0
      %1911 = vmatpush.xpose.msra.mxu0 0.0
      %1912 = vmatpush.xpose.msra.mxu0 0.0
      %1913 = vmatpush.xpose.msra.mxu0 0.0
      %1914 = vmatpush.xpose.msra.mxu0 0.0
      %1915 = vmatpush.xpose.msra.mxu0 0.0
      %1916 = vmatpush.xpose.msra.mxu0 0.0
      %1917 = vmatpush.xpose.msra.mxu0 0.0
      %1918 = vmatpush.xpose.msra.mxu0 0.0
      %1919 = vmatpush.xpose.msra.mxu0 0.0
      %1920 = vmatpush.xpose.msra.mxu0 0.0
      %1921 = vmatpush.xpose.msra.mxu0 0.0
      %1922 = vmatpush.xpose.msra.mxu0 0.0
      %1923 = vmatpush.xpose.msra.mxu0 0.0
      %1924 = vmatpush.xpose.msra.mxu0 0.0
      %1925 = vmatpush.xpose.msra.mxu0 %v1908
      %1926 = vmatmul.f32.gmra.mxu0 %v1905
      %v1927 = vpop.f32.mrf.mxu0
      %v1928 = vadd.f32 0.0, %v1927
      %1929 = vdwg.mxu0
      %v1930 = vmul.f32 %v1850, 0.17677669
      %v1931 = vmul.f32 %v1876, 0.17677669
      %v1932 = vmul.f32 %v1902, 0.17677669
      %v1933 = vmul.f32 %v1928, 0.17677669
      %v1934 = vsel %vm540, %v1930, -inf
      %1935 = vmax.xlane.f32.xlu0 %v1934
      %v1936 = vpop.xlane.xlu0 %1935
      %v1937 = vsel %vm540, %v1931, -inf
      %1938 = vmax.xlane.f32.xlu0 %v1937
      %v1939 = vpop.xlane.xlu0 %1938
      %v1940 = vsel %vm540, %v1932, -inf
      %1941 = vmax.xlane.f32.xlu0 %v1940
      %v1942 = vpop.xlane.xlu0 %1941
      %v1943 = vsel %vm540, %v1933, -inf
      %1944 = vmax.xlane.f32.xlu0 %v1943
      %v1945 = vpop.xlane.xlu0 %1944
      %v1946 = vsub.f32 %v1930, %v1936
      %v1947 = vsub.f32 %v1931, %v1939
      %v1948 = vsub.f32 %v1932, %v1942
      %v1949 = vsub.f32 %v1933, %v1945
      %v1950 = vmul.f32 %v1946, 1.442695
      %v1951 = vpow.pop %v1950
      %v1952 = vmul.f32 %v1947, 1.442695
      %v1953 = vpow.pop %v1952
      %v1954 = vmul.f32 %v1948, 1.442695
      %v1955 = vpow.pop %v1954
      %v1956 = vmul.f32 %v1949, 1.442695
      %v1957 = vpow.pop %v1956
      %v1958 = vsel %vm540, %v1951, 0.0
      %1959 = vadd.xlane.f32.xlu0 %v1958
      %v1960 = vpop.xlane.xlu0 %1959
      %v1961 = vsel %vm540, %v1953, 0.0
      %1962 = vadd.xlane.f32.xlu0 %v1961
      %v1963 = vpop.xlane.xlu0 %1962
      %v1964 = vsel %vm540, %v1955, 0.0
      %1965 = vadd.xlane.f32.xlu0 %v1964
      %v1966 = vpop.xlane.xlu0 %1965
      %v1967 = vsel %vm540, %v1957, 0.0
      %1968 = vadd.xlane.f32.xlu0 %v1967
      %v1969 = vpop.xlane.xlu0 %1968
      %v1970 = vrcp.pop %v1960
      %v1971 = vmul.f32 %v1960, %v1970
      %v1972 = vsub.f32 1.0, %v1971
      %v1973 = vmul.f32 %v1970, %v1972
      %v1974 = vadd.f32 %v1970, %v1973
      %vm1975 = vweird.f32 %v1960
      %vm1976 = vweird.f32 %v1970
      %vm1977 = vmor %vm1975, %vm1976
      %v1978 = vsel %vm1977, %v1970, %v1974
      %v1979 = vand.u32 2147483647, %v1960
      %vm1980 = vcmp.eq.f32.partialorder %v1979, 8.507059e+37
      %v1981 = vand.u32 %v1960, 2147483648
      %v1982 = vor.u32 1.1754944e-38, %v1981
      %v1983 = vsel %vm1980, %v1982, %v1978
      %v1984 = vmul.f32 %v1951, %v1983
      %v1985 = vrcp.pop %v1963
      %v1986 = vmul.f32 %v1963, %v1985
      %v1987 = vsub.f32 1.0, %v1986
      %v1988 = vmul.f32 %v1985, %v1987
      %v1989 = vadd.f32 %v1985, %v1988
      %vm1990 = vweird.f32 %v1963
      %vm1991 = vweird.f32 %v1985
      %vm1992 = vmor %vm1990, %vm1991
      %v1993 = vsel %vm1992, %v1985, %v1989
      %v1994 = vand.u32 2147483647, %v1963
      %vm1995 = vcmp.eq.f32.partialorder %v1994, 8.507059e+37
      %v1996 = vand.u32 %v1963, 2147483648
      %v1997 = vor.u32 1.1754944e-38, %v1996
      %v1998 = vsel %vm1995, %v1997, %v1993
      %v1999 = vmul.f32 %v1953, %v1998
      %v2000 = vrcp.pop %v1966
      %v2001 = vmul.f32 %v1966, %v2000
      %v2002 = vsub.f32 1.0, %v2001
      %v2003 = vmul.f32 %v2000, %v2002
      %v2004 = vadd.f32 %v2000, %v2003
      %vm2005 = vweird.f32 %v1966
      %vm2006 = vweird.f32 %v2000
      %vm2007 = vmor %vm2005, %vm2006
      %v2008 = vsel %vm2007, %v2000, %v2004
      %v2009 = vand.u32 2147483647, %v1966
      %vm2010 = vcmp.eq.f32.partialorder %v2009, 8.507059e+37
      %v2011 = vand.u32 %v1966, 2147483648
      %v2012 = vor.u32 1.1754944e-38, %v2011
      %v2013 = vsel %vm2010, %v2012, %v2008
      %v2014 = vmul.f32 %v1955, %v2013
      %v2015 = vrcp.pop %v1969
      %v2016 = vmul.f32 %v1969, %v2015
      %v2017 = vsub.f32 1.0, %v2016
      %v2018 = vmul.f32 %v2015, %v2017
      %v2019 = vadd.f32 %v2015, %v2018
      %vm2020 = vweird.f32 %v1969
      %vm2021 = vweird.f32 %v2015
      %vm2022 = vmor %vm2020, %vm2021
      %v2023 = vsel %vm2022, %v2015, %v2019
      %v2024 = vand.u32 2147483647, %v1969
      %vm2025 = vcmp.eq.f32.partialorder %v2024, 8.507059e+37
      %v2026 = vand.u32 %v1969, 2147483648
      %v2027 = vor.u32 1.1754944e-38, %v2026
      %v2028 = vsel %vm2025, %v2027, %v2023
      %v2029 = vmul.f32 %v1957, %v2028
      %v2031 = vsel %vm540, %v1984, 0
      %2033 = vmatpush.msra.mxu0 0.0
      %2034 = vmatpush.msra.mxu0 0.0
      %2035 = vmatpush.msra.mxu0 0.0
      %2036 = vmatpush.msra.mxu0 0.0
      %2037 = vmatpush.msra.mxu0 0.0
      %2038 = vmatpush.msra.mxu0 0.0
      %2039 = vmatpush.msra.mxu0 0.0
      %2040 = vmatpush.msra.mxu0 0.0
      %2041 = vmatpush.msra.mxu0 0.0
      %2042 = vmatpush.msra.mxu0 0.0
      %2043 = vmatpush.msra.mxu0 0.0
      %2044 = vmatpush.msra.mxu0 0.0
      %2045 = vmatpush.msra.mxu0 0.0
      %2046 = vmatpush.msra.mxu0 0.0
      %2047 = vmatpush.msra.mxu0 0.0
      %2048 = vmatpush.msra.mxu0 %v1815
      %2049 = vmatmul.f32.gmra.mxu0 %v2031
      %v2050 = vpop.f32.mrf.mxu0
      %v2051 = vadd.f32 0.0, %v2050
      %2052 = vdwg.mxu0
      %v2054 = vsel %vm540, %v1999, 0
      %2056 = vmatpush.msra.mxu0 0.0
      %2057 = vmatpush.msra.mxu0 0.0
      %2058 = vmatpush.msra.mxu0 0.0
      %2059 = vmatpush.msra.mxu0 0.0
      %2060 = vmatpush.msra.mxu0 0.0
      %2061 = vmatpush.msra.mxu0 0.0
      %2062 = vmatpush.msra.mxu0 0.0
      %2063 = vmatpush.msra.mxu0 0.0
      %2064 = vmatpush.msra.mxu0 0.0
      %2065 = vmatpush.msra.mxu0 0.0
      %2066 = vmatpush.msra.mxu0 0.0
      %2067 = vmatpush.msra.mxu0 0.0
      %2068 = vmatpush.msra.mxu0 0.0
      %2069 = vmatpush.msra.mxu0 0.0
      %2070 = vmatpush.msra.mxu0 0.0
      %2071 = vmatpush.msra.mxu0 %v1818
      %2072 = vmatmul.f32.gmra.mxu0 %v2054
      %v2073 = vpop.f32.mrf.mxu0
      %v2074 = vadd.f32 0.0, %v2073
      %2075 = vdwg.mxu0
      %v2077 = vsel %vm540, %v2014, 0
      %2079 = vmatpush.msra.mxu0 0.0
      %2080 = vmatpush.msra.mxu0 0.0
      %2081 = vmatpush.msra.mxu0 0.0
      %2082 = vmatpush.msra.mxu0 0.0
      %2083 = vmatpush.msra.mxu0 0.0
      %2084 = vmatpush.msra.mxu0 0.0
      %2085 = vmatpush.msra.mxu0 0.0
      %2086 = vmatpush.msra.mxu0 0.0
      %2087 = vmatpush.msra.mxu0 0.0
      %2088 = vmatpush.msra.mxu0 0.0
      %2089 = vmatpush.msra.mxu0 0.0
      %2090 = vmatpush.msra.mxu0 0.0
      %2091 = vmatpush.msra.mxu0 0.0
      %2092 = vmatpush.msra.mxu0 0.0
      %2093 = vmatpush.msra.mxu0 0.0
      %2094 = vmatpush.msra.mxu0 %v1821
      %2095 = vmatmul.f32.gmra.mxu0 %v2077
      %v2096 = vpop.f32.mrf.mxu0
      %v2097 = vadd.f32 0.0, %v2096
      %2098 = vdwg.mxu0
      %v2100 = vsel %vm540, %v2029, 0
      %2102 = vmatpush.msra.mxu0 0.0
      %2103 = vmatpush.msra.mxu0 0.0
      %2104 = vmatpush.msra.mxu0 0.0
      %2105 = vmatpush.msra.mxu0 0.0
      %2106 = vmatpush.msra.mxu0 0.0
      %2107 = vmatpush.msra.mxu0 0.0
      %2108 = vmatpush.msra.mxu0 0.0
      %2109 = vmatpush.msra.mxu0 0.0
      %2110 = vmatpush.msra.mxu0 0.0
      %2111 = vmatpush.msra.mxu0 0.0
      %2112 = vmatpush.msra.mxu0 0.0
      %2113 = vmatpush.msra.mxu0 0.0
      %2114 = vmatpush.msra.mxu0 0.0
      %2115 = vmatpush.msra.mxu0 0.0
      %2116 = vmatpush.msra.mxu0 0.0
      %2117 = vmatpush.msra.mxu0 %v1824
      %2118 = vmatmul.f32.gmra.mxu0 %v2100
      %v2119 = vpop.f32.mrf.mxu0
      %v2120 = vadd.f32 0.0, %v2119
      %2121 = vdwg.mxu0
      %2126 = vrot.lane.b32.xlu0 %v2051, 24
      %v2127 = vpop.permute.xlu0 %2126
      %2128 = vrot.lane.b32.xlu0 %v2074, 24
      %v2129 = vpop.permute.xlu0 %2128
      %2130 = vrot.lane.b32.xlu0 %v2097, 24
      %v2131 = vpop.permute.xlu0 %2130
      %2132 = vrot.lane.b32.xlu0 %v2120, 24
      %v2133 = vpop.permute.xlu0 %2132
      %vm2138 = vcmask 261312
      %2139 = vst.msk [vmem:[%s378] sm:$0xff] %vm2138, %v2127
      %2140 = vst.msk [vmem:[%s378 + $0x8] sm:$0xff] %vm2138, %v2129
      %2141 = vst.msk [vmem:[%s378 + $0x10] sm:$0xff] %vm2138, %v2131
      %2142 = vst.msk [vmem:[%s378 + $0x18] sm:$0xff] %vm2138, %v2133
      %s2143 = smul.u32 4, %s20
      %p2144 = scmp.lt.s32.totalorder %s2143, 7
      %s2145 = scalar_select %p2144, %s2143, 7
      %s2146 = smul.addr %s2145, 8
      %s2147 = scalar_lea.vmem %s9, %s2146
      // Predicated region
      $region57: #{tpu_custom_call.1} parent=55 // pred_check
        %p2148 = pneg %p242
      $region58: #{tpu_custom_call.1} parent=55 // pred_check_branch
        %2150 = sbr.rel (%p2148) target = $region60
      $region59: #{tpu_custom_call.1} parent=55 // pred_region
        %s2151 = smul.u32 4, %s20
      $region60: #{tpu_custom_call.1} parent=55 // pred_fallthru
        _
    $region56: #{tpu_custom_call.1} parent=5 // pred_fallthru
      _
    %p2152 = scmp.le.s32.totalorder 2, %s15
    // Predicated region
    $region61: #{tpu_custom_call.1} parent=5 // pred_check
      %p2153 = pneg %p2152
    $region62: #{tpu_custom_call.1} parent=5 // pred_check_branch
      %2155 = sbr.rel (%p2153) target = $region64
    $region63: #{tpu_custom_call.1} parent=5 // pred_region
      %s2156 = ssub.s32 %s15, 2
      // Predicated region
      $region65: #{tpu_custom_call.1} parent=63 // pred_check
        %p2157 = pneg %p248
      $region66: #{tpu_custom_call.1} parent=63 // pred_check_branch
        %2159 = sbr.rel (%p2157) target = $region68
      $region67: #{tpu_custom_call.1} parent=63 // pred_region
        %s2160 = smul.u32 4, %s21
        %p2161 = scmp.lt.s32.totalorder %s2160, 7
        %s2162 = scalar_select %p2161, %s2160, 7
        %s2163 = smul.addr %s2162, 8
        %s2164 = scalar_lea.vmem %s9, %s2163
      $region68: #{tpu_custom_call.1} parent=63 // pred_fallthru
        _
    $region64: #{tpu_custom_call.1} parent=5 // pred_fallthru
      _
  $region6: #{tpu_custom_call.1} parent=0 // loop_footer
    %s19 = sadd.s32 1, %s15
  $region7: #{tpu_custom_call.1} parent=0 // loop_footer_branch
    %14 = sbr.rel target = $region3
  $region8: #{tpu_custom_call.1} parent=0 // loop_exit
    _

</llo_original>
